<compile_context>
chip_gen: v7x
topology: tpu7x:2x2x1
jax: 0.10.0
libtpu: 0.0.40
codegen_flags: <defaults>
</compile_context>

<pallas_src>
import functools

import jax
import jax.numpy as jnp
from jax import lax
from jax.experimental import pallas as pl
from jax.experimental.pallas import tpu as pltpu


# x(M, Din) . w(Dout, Din) -> (M, Dout): NT contraction, no in-kernel transpose.
_NT = (((1,), (1,)), ((), ()))


def _dot_nt(x, w):
    return lax.dot_general(x, w, _NT, preferred_element_type=jnp.float32)


# ----------------------------------------------------------------------------
# Fused kernel: projections + graph attention + fc + (concat->fc1) + LayerNorm
# One grid step = block_b batch elements, all heads.
# ----------------------------------------------------------------------------
def _make_fused_kernel(n_head, d_k, d_v, d_model, block_b, len_q, len_k,
                       inv_temp, ln_eps, return_attn):
    def kernel(q_ref, k_ref, v_ref, fill_ref,
               wq_ref, bq_ref, wk_ref, bk_ref, wv_ref, bv_ref,
               wfc_ref, bfc_ref, wa_ref, wb_ref, b1_ref,
               g_ref, beta_ref,
               out_ref, *maybe_attn_ref):
        f32 = jnp.float32
        attn_ref = maybe_attn_ref[0] if return_attn else None

        # ---- flatten (Bb, N, d_model) -> (Bb*N, d_model); minor dim intact ----
        q2 = q_ref[...].reshape(block_b * len_q, d_model)   # also the residual
        k2 = k_ref[...].reshape(block_b * len_k, d_model)
        v2 = v_ref[...].reshape(block_b * len_k, d_model)

        # ---- fused projections: ONE lane-wide NT matmul each ----
        qp = (_dot_nt(q2, wq_ref[...]) + bq_ref[...]) * inv_temp  # fold 1/temp
        kp = _dot_nt(k2, wk_ref[...]) + bk_ref[...]
        vp = _dot_nt(v2, wv_ref[...]) + bv_ref[...]

        # ---- single combined mask: 0.0 == keep, negative == sentinel ----
        fill = fill_ref[...]                        # (Bb, Nq, Nk)
        is_fill = fill < 0.0

        ctx_parts = []
        for h in range(n_head):                     # static unroll over heads
            qh = qp[:, h * d_k:(h + 1) * d_k].reshape(block_b, len_q, d_k)
            kh = kp[:, h * d_k:(h + 1) * d_k].reshape(block_b, len_k, d_k)
            vh = vp[:, h * d_v:(h + 1) * d_v].reshape(block_b, len_k, d_v)

            s = jnp.einsum('bqd,bkd->bqk', qh, kh, preferred_element_type=f32)
            s = jnp.where(is_fill, fill, s)

            m = jnp.max(s, axis=-1, keepdims=True)
            e = jnp.exp(s - m)
            denom = jnp.sum(e, axis=-1, keepdims=True)
            p = e * pl.reciprocal(denom, approx=False)   # exact -> attn parity
            if return_attn:
                attn_ref[h] = p                     # (Bb, Nq, Nk) at head h

            # TODO(synk): attention dropout / post-fc dropout are identity.
            ctx_parts.append(
                jnp.einsum('bqk,bkd->bqd', p, vh, preferred_element_type=f32))

        # ---- heads -> lanes, then ONE fc matmul contracting n_head*d_v ----
        ctx = jnp.concatenate(ctx_parts, axis=-1)            # (Bb, Nq, H*d_v)
        ctx = ctx.reshape(block_b * len_q, n_head * d_v)
        fc_out = _dot_nt(ctx, wfc_ref[...]) + bfc_ref[...]   # (Bb*Nq, d_model)

        # ---- fc1 over concat(fc_out, residual) via split weights [A | B] ----
        y = (_dot_nt(fc_out, wa_ref[...]) + _dot_nt(q2, wb_ref[...])
             + b1_ref[...])

        # ---- LayerNorm, single-pass stats: (y - mu)/(unbiased_std + eps) ----
        sum_y = jnp.sum(y, axis=-1, keepdims=True)
        sum_y2 = jnp.sum(y * y, axis=-1, keepdims=True)
        mu = sum_y * (1.0 / d_model)
        var = jnp.maximum((sum_y2 - mu * sum_y) / (d_model - 1), 0.0)
        ln = (y - mu) / (jnp.sqrt(var) + ln_eps)
        out = ln * g_ref[...] + beta_ref[...]
        out_ref[...] = out.reshape(block_b, len_q, d_model).astype(out_ref.dtype)

    return kernel


# ----------------------------------------------------------------------------
# Module parameters
# ----------------------------------------------------------------------------
def init_params(key, n_head, d_model, d_k, d_v):
    ks = jax.random.split(key, 10)

    def lin(kw, kb, out_f, in_f):
        w = jax.random.normal(kw, (out_f, in_f), jnp.float32) / jnp.sqrt(in_f)
        b = 0.01 * jax.random.normal(kb, (out_f,), jnp.float32)
        return w, b

    w_qs, b_qs = lin(ks[0], ks[1], n_head * d_k, d_model)
    w_ks, b_ks = lin(ks[2], ks[3], n_head * d_k, d_model)
    w_vs, b_vs = lin(ks[4], ks[5], n_head * d_v, d_model)
    w_fc, b_fc = lin(ks[6], ks[7], d_model, n_head * d_v)
    w_fc1, b_fc1 = lin(ks[8], ks[9], d_model, 2 * d_model)
    return dict(
        w_qs=w_qs, b_qs=b_qs, w_ks=w_ks, b_ks=b_ks, w_vs=w_vs, b_vs=b_vs,
        w_fc=w_fc, b_fc=b_fc, w_fc1=w_fc1, b_fc1=b_fc1,
        ln_gamma=jnp.ones((d_model,), jnp.float32),
        ln_beta=jnp.zeros((d_model,), jnp.float32),
    )


# ----------------------------------------------------------------------------
# Module wrapper: GraphAtt_Mutlihead_Basic.forward
# ----------------------------------------------------------------------------
@functools.partial(jax.jit, static_argnames=("n_head", "d_k", "d_v", "foc_type",
                                              "block_b", "return_attn"))
def graph_att_multihead_basic(params, q, k, v, adj, mask, *,
                              n_head, d_k, d_v, foc_type,
                              block_b=None, return_attn=True):
    sz_b, len_q, d_model = q.shape
    len_k = k.shape[1]
    inv_temp = 1.0 / (float(d_k) ** 0.5)

    # ---- batch blocking: amortize per-step overhead, keep grid >= 2 steps ----
    if block_b is None:
        block_b = 1 if sz_b <= 2 else max(1, min(8, sz_b // 2))
    num_blocks = pl.cdiv(sz_b, block_b)
    sz_b_pad = num_blocks * block_b

    # ---- ONE combined mask (shared across heads): 0 = keep, neg = sentinel.
    #      Priority matches torch: adj<=0 -> -9e15 (overrides), mask -> -9e6.
    if mask is None:
        masked = jnp.zeros((sz_b, len_q, len_k), jnp.bool_)
    else:
        masked = mask > 0
    mask_fill = jnp.where(masked, jnp.float32(-9.0e6), jnp.float32(0.0))
    if foc_type == "local":
        fill = jnp.where(adj > 0, mask_fill, jnp.float32(-9.0e15))
    else:
        fill = jnp.broadcast_to(mask_fill, (sz_b, len_q, len_k))
    fill = fill.astype(jnp.float32)

    if sz_b_pad != sz_b:
        pad3 = ((0, sz_b_pad - sz_b), (0, 0), (0, 0))
        q = jnp.pad(q, pad3)
        k = jnp.pad(k, pad3)
        v = jnp.pad(v, pad3)
        fill = jnp.pad(fill, pad3)      # 0 == keep for padded rows (sliced off)

    # ---- weights stay in torch layout: every in-kernel contraction is NT ----
    wq = params["w_qs"]
    wk = params["w_ks"]
    wv = params["w_vs"]
    bq = params["b_qs"].reshape(1, n_head * d_k)
    bk = params["b_ks"].reshape(1, n_head * d_k)
    bv = params["b_vs"].reshape(1, n_head * d_v)
    wfc = params["w_fc"]                               # (d_model, n_head*d_v)
    bfc = params["b_fc"].reshape(1, d_model)
    # fc1 split: cat(out, residual) @ w_fc1.T == out @ A.T + residual @ B.T
    wa = params["w_fc1"][:, :d_model]
    wb = params["w_fc1"][:, d_model:]
    b1 = params["b_fc1"].reshape(1, d_model)
    gamma = params["ln_gamma"].reshape(1, d_model)
    beta = params["ln_beta"].reshape(1, d_model)

    kernel = _make_fused_kernel(n_head, d_k, d_v, d_model, block_b,
                                len_q, len_k, inv_temp, 1e-3, return_attn)

    batch3 = lambda b: (b, 0, 0)
    const2 = lambda b: (0, 0)

    out_shapes = [jax.ShapeDtypeStruct((sz_b_pad, len_q, d_model), jnp.float32)]
    out_specs = [pl.BlockSpec((block_b, len_q, d_model), batch3)]
    if return_attn:
        out_shapes.append(
            jax.ShapeDtypeStruct((n_head, sz_b_pad, len_q, len_k), jnp.float32))
        out_specs.append(
            pl.BlockSpec((n_head, block_b, len_q, len_k),
                         lambda b: (0, b, 0, 0)))

    # ---- explicit VMEM budget with headroom (capped below v7x's 64 MiB) ----
    blk_bytes = 4 * (3 * block_b * max(len_q, len_k) * d_model
                     + block_b * len_q * len_k
                     + block_b * len_q * d_model
                     + (n_head * block_b * len_q * len_k if return_attn else 0))
    w_bytes = 4 * (2 * n_head * d_k * d_model + 2 * n_head * d_v * d_model
                   + 2 * d_model * d_model + 8 * d_model)
    vmem_limit = int(min(48 * 2**20, max(32 * 2**20, 4 * (blk_bytes + w_bytes))))

    results = pl.pallas_call(
        kernel,
        out_shape=tuple(out_shapes),
        grid=(num_blocks,),
        in_specs=[
            pl.BlockSpec((block_b, len_q, d_model), batch3),   # q (residual)
            pl.BlockSpec((block_b, len_k, d_model), batch3),   # k
            pl.BlockSpec((block_b, len_k, d_model), batch3),   # v
            pl.BlockSpec((block_b, len_q, len_k), batch3),     # combined mask
            pl.BlockSpec((n_head * d_k, d_model), const2),     # w_qs
            pl.BlockSpec((1, n_head * d_k), const2),           # b_qs
            pl.BlockSpec((n_head * d_k, d_model), const2),     # w_ks
            pl.BlockSpec((1, n_head * d_k), const2),           # b_ks
            pl.BlockSpec((n_head * d_v, d_model), const2),     # w_vs
            pl.BlockSpec((1, n_head * d_v), const2),           # b_vs
            pl.BlockSpec((d_model, n_head * d_v), const2),     # w_fc
            pl.BlockSpec((1, d_model), const2),                # b_fc
            pl.BlockSpec((d_model, d_model), const2),          # fc1 A
            pl.BlockSpec((d_model, d_model), const2),          # fc1 B
            pl.BlockSpec((1, d_model), const2),                # b_fc1
            pl.BlockSpec((1, d_model), const2),                # gamma
            pl.BlockSpec((1, d_model), const2),                # beta
        ],
        out_specs=tuple(out_specs),
        compiler_params=pltpu.CompilerParams(
            dimension_semantics=("parallel",),
            vmem_limit_bytes=vmem_limit),
    )(q, k, v, fill, wq, bq, wk, bk, wv, bv, wfc, bfc, wa, wb, b1, gamma, beta)

    out = results[0][:sz_b]
    if return_attn:
        # head-major layout already matches torch: free reshape.
        attn = results[1][:, :sz_b].reshape(n_head * sz_b, len_q, len_k)
        return out, attn
    return out, None


# ----------------------------------------------------------------------------
# Pure-JAX reference of the torch forward (correctness self-check)
# ----------------------------------------------------------------------------
def _reference_forward(params, q, k, v, adj, mask, n_head, d_k, d_v, foc_type):
    sz_b, len_q, d_model = q.shape
    temperature = float(d_k) ** 0.5
    lin = lambda x, w, b: x @ w.T + b
    qp = lin(q, params["w_qs"], params["b_qs"]).reshape(sz_b, len_q, n_head, d_k)
    kp = lin(k, params["w_ks"], params["b_ks"]).reshape(sz_b, -1, n_head, d_k)
    vp = lin(v, params["w_vs"], params["b_vs"]).reshape(sz_b, -1, n_head, d_v)
    q_h = qp.transpose(2, 0, 1, 3).reshape(-1, len_q, d_k)
    k_h = kp.transpose(2, 0, 1, 3).reshape(-1, kp.shape[1], d_k)
    v_h = vp.transpose(2, 0, 1, 3).reshape(-1, vp.shape[1], d_v)
    attn = jnp.einsum('bqd,bkd->bqk', q_h, k_h) / temperature
    attn = jnp.where(jnp.tile(mask > 0, (n_head, 1, 1)), -9.0e6, attn)
    if foc_type == "local":
        attn = jnp.where(jnp.tile(adj, (n_head, 1, 1)) > 0, attn, -9.0e15)
    attn = jax.nn.softmax(attn, axis=-1)
    out_h = jnp.einsum('bqk,bkd->bqd', attn, v_h)
    out = out_h.reshape(n_head, sz_b, len_q, d_v).transpose(1, 2, 0, 3).reshape(
        sz_b, len_q, -1)
    out = out @ params["w_fc"].T + params["b_fc"]
    y = jnp.concatenate([out, q], axis=-1) @ params["w_fc1"].T + params["b_fc1"]
    mu = y.mean(-1, keepdims=True)
    var = ((y - mu) ** 2).sum(-1, keepdims=True) / (d_model - 1)
    ln = (y - mu) / (jnp.sqrt(var) + 1e-3)
    return ln * params["ln_gamma"] + params["ln_beta"], attn


if __name__ == "__main__":
    n_head, d_model, d_k, d_v = 4, 32, 8, 8
    sz_b, N = 2, 8
    foc_type = "local"

    key = jax.random.PRNGKey(0)
    kp, kq, kk, kv, ka = jax.random.split(key, 5)

    params = init_params(kp, n_head, d_model, d_k, d_v)
    q = jax.random.normal(kq, (sz_b, N, d_model), jnp.float32)
    k = jax.random.normal(kk, (sz_b, N, d_model), jnp.float32)
    v = jax.random.normal(kv, (sz_b, N, d_model), jnp.float32)

    # random 0/1 adjacency with self loops
    adj = (jax.random.uniform(ka, (sz_b, N, N)) > 0.5).astype(jnp.float32)
    adj = jnp.maximum(adj, jnp.eye(N, dtype=jnp.float32)[None, :, :])
    # no positions masked (mask == 0 everywhere)
    mask = jnp.zeros((sz_b, N, N), jnp.float32)

    out, attn = graph_att_multihead_basic(
        params, q, k, v, adj, mask,
        n_head=n_head, d_k=d_k, d_v=d_v, foc_type=foc_type)
    jax.block_until_ready((out, attn))

    assert out.shape == (sz_b, N, d_model)
    assert attn.shape == (n_head * sz_b, N, N)

    out_ref, attn_ref = _reference_forward(
        params, q, k, v, adj, mask, n_head, d_k, d_v, foc_type)
    assert jnp.allclose(attn, attn_ref, atol=1e-4, rtol=1e-4)
    assert jnp.allclose(out, out_ref, atol=1e-3, rtol=1e-3)

    print("KERNEL_OK")
</pallas_src>

<mosaic_0001>
module attributes {stable_mosaic.version = 11 : i64} {
  func.func @kernel(%arg0: i32, %arg1: memref<1x8x32xf32, #tpu.memory_space<vmem>>, %arg2: memref<1x8x32xf32, #tpu.memory_space<vmem>>, %arg3: memref<1x8x32xf32, #tpu.memory_space<vmem>>, %arg4: memref<1x8x8xf32, #tpu.memory_space<vmem>>, %arg5: memref<32x32xf32, #tpu.memory_space<vmem>>, %arg6: memref<1x32xf32, #tpu.memory_space<vmem>>, %arg7: memref<32x32xf32, #tpu.memory_space<vmem>>, %arg8: memref<1x32xf32, #tpu.memory_space<vmem>>, %arg9: memref<32x32xf32, #tpu.memory_space<vmem>>, %arg10: memref<1x32xf32, #tpu.memory_space<vmem>>, %arg11: memref<32x32xf32, #tpu.memory_space<vmem>>, %arg12: memref<1x32xf32, #tpu.memory_space<vmem>>, %arg13: memref<32x32xf32, #tpu.memory_space<vmem>>, %arg14: memref<32x32xf32, #tpu.memory_space<vmem>>, %arg15: memref<1x32xf32, #tpu.memory_space<vmem>>, %arg16: memref<1x32xf32, #tpu.memory_space<vmem>>, %arg17: memref<1x32xf32, #tpu.memory_space<vmem>>, %arg18: memref<1x8x32xf32, #tpu.memory_space<vmem>>, %arg19: memref<4x1x8x8xf32, #tpu.memory_space<vmem>>) attributes {dimension_semantics = [#tpu.dimension_semantics<parallel>], iteration_bounds = array<i64: 2>, scalar_prefetch = 0 : i64, scratch_operands = 0 : i64, tpu.core_type = #tpu.core_type<tc>, window_params = [{transform_indices = @transform_0, window_bounds = array<i64: 1, 8, 32>}, {transform_indices = @transform_1, window_bounds = array<i64: 1, 8, 32>}, {transform_indices = @transform_2, window_bounds = array<i64: 1, 8, 32>}, {transform_indices = @transform_3, window_bounds = array<i64: 1, 8, 8>}, {pipeline_mode = #tpu.pipeline_mode<synchronous>, transform_indices = @transform_4, window_bounds = array<i64: 32, 32>}, {pipeline_mode = #tpu.pipeline_mode<synchronous>, transform_indices = @transform_5, window_bounds = array<i64: 1, 32>}, {pipeline_mode = #tpu.pipeline_mode<synchronous>, transform_indices = @transform_6, window_bounds = array<i64: 32, 32>}, {pipeline_mode = #tpu.pipeline_mode<synchronous>, transform_indices = @transform_7, window_bounds = array<i64: 1, 32>}, {pipeline_mode = #tpu.pipeline_mode<synchronous>, transform_indices = @transform_8, window_bounds = array<i64: 32, 32>}, {pipeline_mode = #tpu.pipeline_mode<synchronous>, transform_indices = @transform_9, window_bounds = array<i64: 1, 32>}, {pipeline_mode = #tpu.pipeline_mode<synchronous>, transform_indices = @transform_10, window_bounds = array<i64: 32, 32>}, {pipeline_mode = #tpu.pipeline_mode<synchronous>, transform_indices = @transform_11, window_bounds = array<i64: 1, 32>}, {pipeline_mode = #tpu.pipeline_mode<synchronous>, transform_indices = @transform_12, window_bounds = array<i64: 32, 32>}, {pipeline_mode = #tpu.pipeline_mode<synchronous>, transform_indices = @transform_13, window_bounds = array<i64: 32, 32>}, {pipeline_mode = #tpu.pipeline_mode<synchronous>, transform_indices = @transform_14, window_bounds = array<i64: 1, 32>}, {pipeline_mode = #tpu.pipeline_mode<synchronous>, transform_indices = @transform_15, window_bounds = array<i64: 1, 32>}, {pipeline_mode = #tpu.pipeline_mode<synchronous>, transform_indices = @transform_16, window_bounds = array<i64: 1, 32>}, {transform_indices = @transform_17, window_bounds = array<i64: 1, 8, 32>}, {transform_indices = @transform_18, window_bounds = array<i64: 4, 1, 8, 8>}]} {
    %c0 = arith.constant 0 : index
    %c0_0 = arith.constant 0 : index
    %c0_1 = arith.constant 0 : index
    %0 = vector.load %arg1[%c0, %c0_0, %c0_1] : memref<1x8x32xf32, #tpu.memory_space<vmem>>, vector<1x8x32xf32>
    %1 = vector.shape_cast %0 : vector<1x8x32xf32> to vector<8x32xf32>
    %c0_2 = arith.constant 0 : index
    %c0_3 = arith.constant 0 : index
    %c0_4 = arith.constant 0 : index
    %2 = vector.load %arg2[%c0_2, %c0_3, %c0_4] : memref<1x8x32xf32, #tpu.memory_space<vmem>>, vector<1x8x32xf32>
    %3 = vector.shape_cast %2 : vector<1x8x32xf32> to vector<8x32xf32>
    %c0_5 = arith.constant 0 : index
    %c0_6 = arith.constant 0 : index
    %c0_7 = arith.constant 0 : index
    %4 = vector.load %arg3[%c0_5, %c0_6, %c0_7] : memref<1x8x32xf32, #tpu.memory_space<vmem>>, vector<1x8x32xf32>
    %5 = vector.shape_cast %4 : vector<1x8x32xf32> to vector<8x32xf32>
    %c0_8 = arith.constant 0 : index
    %c0_9 = arith.constant 0 : index
    %6 = vector.load %arg5[%c0_8, %c0_9] : memref<32x32xf32, #tpu.memory_space<vmem>>, vector<32x32xf32>
    %cst = arith.constant dense<0.000000e+00> : vector<8x32xf32>
    %7 = tpu.matmul %1, %6, %cst {dimension_numbers = #tpu.dot_dimension_numbers<[1], [1], [0], [0], [0, 0, 1, 0], [], []>} : vector<8x32xf32>, vector<32x32xf32>, vector<8x32xf32> -> vector<8x32xf32>
    %c0_10 = arith.constant 0 : index
    %c0_11 = arith.constant 0 : index
    %8 = vector.load %arg6[%c0_10, %c0_11] : memref<1x32xf32, #tpu.memory_space<vmem>>, vector<1x32xf32>
    %9 = vector.broadcast %8 : vector<1x32xf32> to vector<8x32xf32>
    %10 = arith.addf %7, %9 : vector<8x32xf32>
    %cst_12 = arith.constant 0.353553385 : f32
    %11 = vector.broadcast %cst_12 : f32 to vector<8x32xf32>
    %12 = arith.mulf %10, %11 : vector<8x32xf32>
    %c0_13 = arith.constant 0 : index
    %c0_14 = arith.constant 0 : index
    %13 = vector.load %arg7[%c0_13, %c0_14] : memref<32x32xf32, #tpu.memory_space<vmem>>, vector<32x32xf32>
    %cst_15 = arith.constant dense<0.000000e+00> : vector<8x32xf32>
    %14 = tpu.matmul %3, %13, %cst_15 {dimension_numbers = #tpu.dot_dimension_numbers<[1], [1], [0], [0], [0, 0, 1, 0], [], []>} : vector<8x32xf32>, vector<32x32xf32>, vector<8x32xf32> -> vector<8x32xf32>
    %c0_16 = arith.constant 0 : index
    %c0_17 = arith.constant 0 : index
    %15 = vector.load %arg8[%c0_16, %c0_17] : memref<1x32xf32, #tpu.memory_space<vmem>>, vector<1x32xf32>
    %16 = vector.broadcast %15 : vector<1x32xf32> to vector<8x32xf32>
    %17 = arith.addf %14, %16 : vector<8x32xf32>
    %c0_18 = arith.constant 0 : index
    %c0_19 = arith.constant 0 : index
    %18 = vector.load %arg9[%c0_18, %c0_19] : memref<32x32xf32, #tpu.memory_space<vmem>>, vector<32x32xf32>
    %cst_20 = arith.constant dense<0.000000e+00> : vector<8x32xf32>
    %19 = tpu.matmul %5, %18, %cst_20 {dimension_numbers = #tpu.dot_dimension_numbers<[1], [1], [0], [0], [0, 0, 1, 0], [], []>} : vector<8x32xf32>, vector<32x32xf32>, vector<8x32xf32> -> vector<8x32xf32>
    %c0_21 = arith.constant 0 : index
    %c0_22 = arith.constant 0 : index
    %20 = vector.load %arg10[%c0_21, %c0_22] : memref<1x32xf32, #tpu.memory_space<vmem>>, vector<1x32xf32>
    %21 = vector.broadcast %20 : vector<1x32xf32> to vector<8x32xf32>
    %22 = arith.addf %19, %21 : vector<8x32xf32>
    %c0_23 = arith.constant 0 : index
    %c0_24 = arith.constant 0 : index
    %c0_25 = arith.constant 0 : index
    %23 = vector.load %arg4[%c0_23, %c0_24, %c0_25] : memref<1x8x8xf32, #tpu.memory_space<vmem>>, vector<1x8x8xf32>
    %cst_26 = arith.constant 0.000000e+00 : f32
    %24 = vector.broadcast %cst_26 : f32 to vector<1x8x8xf32>
    %25 = arith.cmpf olt, %23, %24 : vector<1x8x8xf32>
    %26 = vector.extract_strided_slice %12 {offsets = [0, 0], sizes = [8, 8], strides = [1, 1]} : vector<8x32xf32> to vector<8x8xf32>
    %27 = vector.shape_cast %26 : vector<8x8xf32> to vector<1x8x8xf32>
    %28 = vector.extract_strided_slice %17 {offsets = [0, 0], sizes = [8, 8], strides = [1, 1]} : vector<8x32xf32> to vector<8x8xf32>
    %29 = vector.shape_cast %28 : vector<8x8xf32> to vector<1x8x8xf32>
    %30 = vector.extract_strided_slice %22 {offsets = [0, 0], sizes = [8, 8], strides = [1, 1]} : vector<8x32xf32> to vector<8x8xf32>
    %31 = vector.shape_cast %30 : vector<8x8xf32> to vector<1x8x8xf32>
    "tpu.trace_start"() <{level = 10 : i32, message = "bqd,bkd->bqk"}> : () -> ()
    %cst_27 = arith.constant dense<0.000000e+00> : vector<1x8x8xf32>
    %32 = tpu.matmul %27, %29, %cst_27 {dimension_numbers = #tpu.dot_dimension_numbers<[2], [2], [1], [1], [0, 0, 0, 1, 1, 1], [0], [0]>} : vector<1x8x8xf32>, vector<1x8x8xf32>, vector<1x8x8xf32> -> vector<1x8x8xf32>
    "tpu.trace_stop"() : () -> ()
    %33 = arith.select %25, %23, %32 : vector<1x8x8xi1>, vector<1x8x8xf32>
    %cst_28 = arith.constant dense<0xFF800000> : vector<1x8xf32>
    %34 = vector.multi_reduction <maximumf>, %33, %cst_28 [2] : vector<1x8x8xf32> to vector<1x8xf32>
    %35 = vector.shape_cast %34 : vector<1x8xf32> to vector<1x8x1xf32>
    %36 = vector.broadcast %35 : vector<1x8x1xf32> to vector<1x8x8xf32>
    %37 = arith.subf %33, %36 : vector<1x8x8xf32>
    %38 = math.exp %37 : vector<1x8x8xf32>
    %cst_29 = arith.constant dense<0.000000e+00> : vector<1x8xf32>
    %39 = vector.multi_reduction <add>, %38, %cst_29 [2] : vector<1x8x8xf32> to vector<1x8xf32>
    %40 = vector.shape_cast %39 : vector<1x8xf32> to vector<1x8x1xf32>
    %41 = tpu.reciprocal %40 : vector<1x8x1xf32> -> vector<1x8x1xf32>
    %42 = vector.broadcast %41 : vector<1x8x1xf32> to vector<1x8x8xf32>
    %43 = arith.mulf %38, %42 : vector<1x8x8xf32>
    %c0_30 = arith.constant 0 : index
    %c0_31 = arith.constant 0 : index
    %c0_32 = arith.constant 0 : index
    %c0_33 = arith.constant 0 : index
    %44 = vector.load %arg19[%c0_30, %c0_31, %c0_32, %c0_33] : memref<4x1x8x8xf32, #tpu.memory_space<vmem>>, vector<1x1x8x8xf32>
    %45 = vector.shape_cast %44 : vector<1x1x8x8xf32> to vector<1x8x8xf32>
    %46 = vector.shape_cast %43 : vector<1x8x8xf32> to vector<1x1x8x8xf32>
    tpu.vector_store %arg19[%c0_30, %c0_31, %c0_32, %c0_33], %46 {strides = array<i32>} : memref<4x1x8x8xf32, #tpu.memory_space<vmem>>, vector<1x1x8x8xf32>,
    "tpu.trace_start"() <{level = 10 : i32, message = "bqk,bkd->bqd"}> : () -> ()
    %cst_34 = arith.constant dense<0.000000e+00> : vector<1x8x8xf32>
    %47 = tpu.matmul %43, %31, %cst_34 {dimension_numbers = #tpu.dot_dimension_numbers<[2], [1], [1], [2], [0, 0, 0, 1, 1, 2], [0], [0]>} : vector<1x8x8xf32>, vector<1x8x8xf32>, vector<1x8x8xf32> -> vector<1x8x8xf32>
    "tpu.trace_stop"() : () -> ()
    %48 = vector.extract_strided_slice %12 {offsets = [0, 8], sizes = [8, 8], strides = [1, 1]} : vector<8x32xf32> to vector<8x8xf32>
    %49 = vector.shape_cast %48 : vector<8x8xf32> to vector<1x8x8xf32>
    %50 = vector.extract_strided_slice %17 {offsets = [0, 8], sizes = [8, 8], strides = [1, 1]} : vector<8x32xf32> to vector<8x8xf32>
    %51 = vector.shape_cast %50 : vector<8x8xf32> to vector<1x8x8xf32>
    %52 = vector.extract_strided_slice %22 {offsets = [0, 8], sizes = [8, 8], strides = [1, 1]} : vector<8x32xf32> to vector<8x8xf32>
    %53 = vector.shape_cast %52 : vector<8x8xf32> to vector<1x8x8xf32>
    "tpu.trace_start"() <{level = 10 : i32, message = "bqd,bkd->bqk"}> : () -> ()
    %cst_35 = arith.constant dense<0.000000e+00> : vector<1x8x8xf32>
    %54 = tpu.matmul %49, %51, %cst_35 {dimension_numbers = #tpu.dot_dimension_numbers<[2], [2], [1], [1], [0, 0, 0, 1, 1, 1], [0], [0]>} : vector<1x8x8xf32>, vector<1x8x8xf32>, vector<1x8x8xf32> -> vector<1x8x8xf32>
    "tpu.trace_stop"() : () -> ()
    %55 = arith.select %25, %23, %54 : vector<1x8x8xi1>, vector<1x8x8xf32>
    %cst_36 = arith.constant dense<0xFF800000> : vector<1x8xf32>
    %56 = vector.multi_reduction <maximumf>, %55, %cst_36 [2] : vector<1x8x8xf32> to vector<1x8xf32>
    %57 = vector.shape_cast %56 : vector<1x8xf32> to vector<1x8x1xf32>
    %58 = vector.broadcast %57 : vector<1x8x1xf32> to vector<1x8x8xf32>
    %59 = arith.subf %55, %58 : vector<1x8x8xf32>
    %60 = math.exp %59 : vector<1x8x8xf32>
    %cst_37 = arith.constant dense<0.000000e+00> : vector<1x8xf32>
    %61 = vector.multi_reduction <add>, %60, %cst_37 [2] : vector<1x8x8xf32> to vector<1x8xf32>
    %62 = vector.shape_cast %61 : vector<1x8xf32> to vector<1x8x1xf32>
    %63 = tpu.reciprocal %62 : vector<1x8x1xf32> -> vector<1x8x1xf32>
    %64 = vector.broadcast %63 : vector<1x8x1xf32> to vector<1x8x8xf32>
    %65 = arith.mulf %60, %64 : vector<1x8x8xf32>
    %c1 = arith.constant 1 : index
    %c0_38 = arith.constant 0 : index
    %c0_39 = arith.constant 0 : index
    %c0_40 = arith.constant 0 : index
    %66 = vector.load %arg19[%c1, %c0_38, %c0_39, %c0_40] : memref<4x1x8x8xf32, #tpu.memory_space<vmem>>, vector<1x1x8x8xf32>
    %67 = vector.shape_cast %66 : vector<1x1x8x8xf32> to vector<1x8x8xf32>
    %68 = vector.shape_cast %65 : vector<1x8x8xf32> to vector<1x1x8x8xf32>
    tpu.vector_store %arg19[%c1, %c0_38, %c0_39, %c0_40], %68 {strides = array<i32>} : memref<4x1x8x8xf32, #tpu.memory_space<vmem>>, vector<1x1x8x8xf32>,
    "tpu.trace_start"() <{level = 10 : i32, message = "bqk,bkd->bqd"}> : () -> ()
    %cst_41 = arith.constant dense<0.000000e+00> : vector<1x8x8xf32>
    %69 = tpu.matmul %65, %53, %cst_41 {dimension_numbers = #tpu.dot_dimension_numbers<[2], [1], [1], [2], [0, 0, 0, 1, 1, 2], [0], [0]>} : vector<1x8x8xf32>, vector<1x8x8xf32>, vector<1x8x8xf32> -> vector<1x8x8xf32>
    "tpu.trace_stop"() : () -> ()
    %70 = vector.extract_strided_slice %12 {offsets = [0, 16], sizes = [8, 8], strides = [1, 1]} : vector<8x32xf32> to vector<8x8xf32>
    %71 = vector.shape_cast %70 : vector<8x8xf32> to vector<1x8x8xf32>
    %72 = vector.extract_strided_slice %17 {offsets = [0, 16], sizes = [8, 8], strides = [1, 1]} : vector<8x32xf32> to vector<8x8xf32>
    %73 = vector.shape_cast %72 : vector<8x8xf32> to vector<1x8x8xf32>
    %74 = vector.extract_strided_slice %22 {offsets = [0, 16], sizes = [8, 8], strides = [1, 1]} : vector<8x32xf32> to vector<8x8xf32>
    %75 = vector.shape_cast %74 : vector<8x8xf32> to vector<1x8x8xf32>
    "tpu.trace_start"() <{level = 10 : i32, message = "bqd,bkd->bqk"}> : () -> ()
    %cst_42 = arith.constant dense<0.000000e+00> : vector<1x8x8xf32>
    %76 = tpu.matmul %71, %73, %cst_42 {dimension_numbers = #tpu.dot_dimension_numbers<[2], [2], [1], [1], [0, 0, 0, 1, 1, 1], [0], [0]>} : vector<1x8x8xf32>, vector<1x8x8xf32>, vector<1x8x8xf32> -> vector<1x8x8xf32>
    "tpu.trace_stop"() : () -> ()
    %77 = arith.select %25, %23, %76 : vector<1x8x8xi1>, vector<1x8x8xf32>
    %cst_43 = arith.constant dense<0xFF800000> : vector<1x8xf32>
    %78 = vector.multi_reduction <maximumf>, %77, %cst_43 [2] : vector<1x8x8xf32> to vector<1x8xf32>
    %79 = vector.shape_cast %78 : vector<1x8xf32> to vector<1x8x1xf32>
    %80 = vector.broadcast %79 : vector<1x8x1xf32> to vector<1x8x8xf32>
    %81 = arith.subf %77, %80 : vector<1x8x8xf32>
    %82 = math.exp %81 : vector<1x8x8xf32>
    %cst_44 = arith.constant dense<0.000000e+00> : vector<1x8xf32>
    %83 = vector.multi_reduction <add>, %82, %cst_44 [2] : vector<1x8x8xf32> to vector<1x8xf32>
    %84 = vector.shape_cast %83 : vector<1x8xf32> to vector<1x8x1xf32>
    %85 = tpu.reciprocal %84 : vector<1x8x1xf32> -> vector<1x8x1xf32>
    %86 = vector.broadcast %85 : vector<1x8x1xf32> to vector<1x8x8xf32>
    %87 = arith.mulf %82, %86 : vector<1x8x8xf32>
    %c2 = arith.constant 2 : index
    %c0_45 = arith.constant 0 : index
    %c0_46 = arith.constant 0 : index
    %c0_47 = arith.constant 0 : index
    %88 = vector.load %arg19[%c2, %c0_45, %c0_46, %c0_47] : memref<4x1x8x8xf32, #tpu.memory_space<vmem>>, vector<1x1x8x8xf32>
    %89 = vector.shape_cast %88 : vector<1x1x8x8xf32> to vector<1x8x8xf32>
    %90 = vector.shape_cast %87 : vector<1x8x8xf32> to vector<1x1x8x8xf32>
    tpu.vector_store %arg19[%c2, %c0_45, %c0_46, %c0_47], %90 {strides = array<i32>} : memref<4x1x8x8xf32, #tpu.memory_space<vmem>>, vector<1x1x8x8xf32>,
    "tpu.trace_start"() <{level = 10 : i32, message = "bqk,bkd->bqd"}> : () -> ()
    %cst_48 = arith.constant dense<0.000000e+00> : vector<1x8x8xf32>
    %91 = tpu.matmul %87, %75, %cst_48 {dimension_numbers = #tpu.dot_dimension_numbers<[2], [1], [1], [2], [0, 0, 0, 1, 1, 2], [0], [0]>} : vector<1x8x8xf32>, vector<1x8x8xf32>, vector<1x8x8xf32> -> vector<1x8x8xf32>
    "tpu.trace_stop"() : () -> ()
    %92 = vector.extract_strided_slice %12 {offsets = [0, 24], sizes = [8, 8], strides = [1, 1]} : vector<8x32xf32> to vector<8x8xf32>
    %93 = vector.shape_cast %92 : vector<8x8xf32> to vector<1x8x8xf32>
    %94 = vector.extract_strided_slice %17 {offsets = [0, 24], sizes = [8, 8], strides = [1, 1]} : vector<8x32xf32> to vector<8x8xf32>
    %95 = vector.shape_cast %94 : vector<8x8xf32> to vector<1x8x8xf32>
    %96 = vector.extract_strided_slice %22 {offsets = [0, 24], sizes = [8, 8], strides = [1, 1]} : vector<8x32xf32> to vector<8x8xf32>
    %97 = vector.shape_cast %96 : vector<8x8xf32> to vector<1x8x8xf32>
    "tpu.trace_start"() <{level = 10 : i32, message = "bqd,bkd->bqk"}> : () -> ()
    %cst_49 = arith.constant dense<0.000000e+00> : vector<1x8x8xf32>
    %98 = tpu.matmul %93, %95, %cst_49 {dimension_numbers = #tpu.dot_dimension_numbers<[2], [2], [1], [1], [0, 0, 0, 1, 1, 1], [0], [0]>} : vector<1x8x8xf32>, vector<1x8x8xf32>, vector<1x8x8xf32> -> vector<1x8x8xf32>
    "tpu.trace_stop"() : () -> ()
    %99 = arith.select %25, %23, %98 : vector<1x8x8xi1>, vector<1x8x8xf32>
    %cst_50 = arith.constant dense<0xFF800000> : vector<1x8xf32>
    %100 = vector.multi_reduction <maximumf>, %99, %cst_50 [2] : vector<1x8x8xf32> to vector<1x8xf32>
    %101 = vector.shape_cast %100 : vector<1x8xf32> to vector<1x8x1xf32>
    %102 = vector.broadcast %101 : vector<1x8x1xf32> to vector<1x8x8xf32>
    %103 = arith.subf %99, %102 : vector<1x8x8xf32>
    %104 = math.exp %103 : vector<1x8x8xf32>
    %cst_51 = arith.constant dense<0.000000e+00> : vector<1x8xf32>
    %105 = vector.multi_reduction <add>, %104, %cst_51 [2] : vector<1x8x8xf32> to vector<1x8xf32>
    %106 = vector.shape_cast %105 : vector<1x8xf32> to vector<1x8x1xf32>
    %107 = tpu.reciprocal %106 : vector<1x8x1xf32> -> vector<1x8x1xf32>
    %108 = vector.broadcast %107 : vector<1x8x1xf32> to vector<1x8x8xf32>
    %109 = arith.mulf %104, %108 : vector<1x8x8xf32>
    %c3 = arith.constant 3 : index
    %c0_52 = arith.constant 0 : index
    %c0_53 = arith.constant 0 : index
    %c0_54 = arith.constant 0 : index
    %110 = vector.load %arg19[%c3, %c0_52, %c0_53, %c0_54] : memref<4x1x8x8xf32, #tpu.memory_space<vmem>>, vector<1x1x8x8xf32>
    %111 = vector.shape_cast %110 : vector<1x1x8x8xf32> to vector<1x8x8xf32>
    %112 = vector.shape_cast %109 : vector<1x8x8xf32> to vector<1x1x8x8xf32>
    tpu.vector_store %arg19[%c3, %c0_52, %c0_53, %c0_54], %112 {strides = array<i32>} : memref<4x1x8x8xf32, #tpu.memory_space<vmem>>, vector<1x1x8x8xf32>,
    "tpu.trace_start"() <{level = 10 : i32, message = "bqk,bkd->bqd"}> : () -> ()
    %cst_55 = arith.constant dense<0.000000e+00> : vector<1x8x8xf32>
    %113 = tpu.matmul %109, %97, %cst_55 {dimension_numbers = #tpu.dot_dimension_numbers<[2], [1], [1], [2], [0, 0, 0, 1, 1, 2], [0], [0]>} : vector<1x8x8xf32>, vector<1x8x8xf32>, vector<1x8x8xf32> -> vector<1x8x8xf32>
    "tpu.trace_stop"() : () -> ()
    %114 = tpu.concatenate %47, %69, %91, %113 in 2 : vector<1x8x8xf32>, vector<1x8x8xf32>, vector<1x8x8xf32>, vector<1x8x8xf32> -> vector<1x8x32xf32>
    %115 = vector.shape_cast %114 : vector<1x8x32xf32> to vector<8x32xf32>
    %c0_56 = arith.constant 0 : index
    %c0_57 = arith.constant 0 : index
    %116 = vector.load %arg11[%c0_56, %c0_57] : memref<32x32xf32, #tpu.memory_space<vmem>>, vector<32x32xf32>
    %cst_58 = arith.constant dense<0.000000e+00> : vector<8x32xf32>
    %117 = tpu.matmul %115, %116, %cst_58 {dimension_numbers = #tpu.dot_dimension_numbers<[1], [1], [0], [0], [0, 0, 1, 0], [], []>} : vector<8x32xf32>, vector<32x32xf32>, vector<8x32xf32> -> vector<8x32xf32>
    %c0_59 = arith.constant 0 : index
    %c0_60 = arith.constant 0 : index
    %118 = vector.load %arg12[%c0_59, %c0_60] : memref<1x32xf32, #tpu.memory_space<vmem>>, vector<1x32xf32>
    %119 = vector.broadcast %118 : vector<1x32xf32> to vector<8x32xf32>
    %120 = arith.addf %117, %119 : vector<8x32xf32>
    %c0_61 = arith.constant 0 : index
    %c0_62 = arith.constant 0 : index
    %121 = vector.load %arg13[%c0_61, %c0_62] : memref<32x32xf32, #tpu.memory_space<vmem>>, vector<32x32xf32>
    %cst_63 = arith.constant dense<0.000000e+00> : vector<8x32xf32>
    %122 = tpu.matmul %120, %121, %cst_63 {dimension_numbers = #tpu.dot_dimension_numbers<[1], [1], [0], [0], [0, 0, 1, 0], [], []>} : vector<8x32xf32>, vector<32x32xf32>, vector<8x32xf32> -> vector<8x32xf32>
    %c0_64 = arith.constant 0 : index
    %c0_65 = arith.constant 0 : index
    %123 = vector.load %arg14[%c0_64, %c0_65] : memref<32x32xf32, #tpu.memory_space<vmem>>, vector<32x32xf32>
    %cst_66 = arith.constant dense<0.000000e+00> : vector<8x32xf32>
    %124 = tpu.matmul %1, %123, %cst_66 {dimension_numbers = #tpu.dot_dimension_numbers<[1], [1], [0], [0], [0, 0, 1, 0], [], []>} : vector<8x32xf32>, vector<32x32xf32>, vector<8x32xf32> -> vector<8x32xf32>
    %125 = arith.addf %122, %124 : vector<8x32xf32>
    %c0_67 = arith.constant 0 : index
    %c0_68 = arith.constant 0 : index
    %126 = vector.load %arg15[%c0_67, %c0_68] : memref<1x32xf32, #tpu.memory_space<vmem>>, vector<1x32xf32>
    %127 = vector.broadcast %126 : vector<1x32xf32> to vector<8x32xf32>
    %128 = arith.addf %125, %127 : vector<8x32xf32>
    %cst_69 = arith.constant dense<0.000000e+00> : vector<8xf32>
    %129 = vector.multi_reduction <add>, %128, %cst_69 [1] : vector<8x32xf32> to vector<8xf32>
    %130 = vector.shape_cast %129 : vector<8xf32> to vector<8x1xf32>
    %131 = arith.mulf %128, %128 : vector<8x32xf32>
    %cst_70 = arith.constant dense<0.000000e+00> : vector<8xf32>
    %132 = vector.multi_reduction <add>, %131, %cst_70 [1] : vector<8x32xf32> to vector<8xf32>
    %133 = vector.shape_cast %132 : vector<8xf32> to vector<8x1xf32>
    %cst_71 = arith.constant 3.125000e-02 : f32
    %134 = vector.broadcast %cst_71 : f32 to vector<8x1xf32>
    %135 = arith.mulf %130, %134 : vector<8x1xf32>
    %136 = arith.mulf %135, %130 : vector<8x1xf32>
    %137 = arith.subf %133, %136 : vector<8x1xf32>
    %cst_72 = arith.constant 3.100000e+01 : f32
    %138 = vector.broadcast %cst_72 : f32 to vector<8x1xf32>
    %139 = arith.divf %137, %138 : vector<8x1xf32>
    %cst_73 = arith.constant 0.000000e+00 : f32
    %140 = vector.broadcast %cst_73 : f32 to vector<8x1xf32>
    %141 = arith.maximumf %139, %140 : vector<8x1xf32>
    %142 = vector.broadcast %135 : vector<8x1xf32> to vector<8x32xf32>
    %143 = arith.subf %128, %142 : vector<8x32xf32>
    %144 = math.sqrt %141 : vector<8x1xf32>
    %cst_74 = arith.constant 1.000000e-03 : f32
    %145 = vector.broadcast %cst_74 : f32 to vector<8x1xf32>
    %146 = arith.addf %144, %145 : vector<8x1xf32>
    %147 = vector.broadcast %146 : vector<8x1xf32> to vector<8x32xf32>
    %148 = arith.divf %143, %147 : vector<8x32xf32>
    %c0_75 = arith.constant 0 : index
    %c0_76 = arith.constant 0 : index
    %149 = vector.load %arg16[%c0_75, %c0_76] : memref<1x32xf32, #tpu.memory_space<vmem>>, vector<1x32xf32>
    %150 = vector.broadcast %149 : vector<1x32xf32> to vector<8x32xf32>
    %151 = arith.mulf %148, %150 : vector<8x32xf32>
    %c0_77 = arith.constant 0 : index
    %c0_78 = arith.constant 0 : index
    %152 = vector.load %arg17[%c0_77, %c0_78] : memref<1x32xf32, #tpu.memory_space<vmem>>, vector<1x32xf32>
    %153 = vector.broadcast %152 : vector<1x32xf32> to vector<8x32xf32>
    %154 = arith.addf %151, %153 : vector<8x32xf32>
    %155 = vector.shape_cast %154 : vector<8x32xf32> to vector<1x8x32xf32>
    %c0_79 = arith.constant 0 : index
    %c0_80 = arith.constant 0 : index
    %c0_81 = arith.constant 0 : index
    %156 = vector.load %arg18[%c0_79, %c0_80, %c0_81] : memref<1x8x32xf32, #tpu.memory_space<vmem>>, vector<1x8x32xf32>
    tpu.vector_store %arg18[%c0_79, %c0_80, %c0_81], %155 {strides = array<i32>} : memref<1x8x32xf32, #tpu.memory_space<vmem>>, vector<1x8x32xf32>,
    return
  }
  func.func @transform_0(%arg0: i32) -> (i32, i32, i32) {
    %c0_i32 = arith.constant 0 : i32
    %c0_i32_0 = arith.constant 0 : i32
    %c0_i32_1 = arith.constant 0 : i32
    return %arg0, %c0_i32, %c0_i32_0 : i32, i32, i32
  }
  func.func @transform_1(%arg0: i32) -> (i32, i32, i32) {
    %c0_i32 = arith.constant 0 : i32
    %c0_i32_0 = arith.constant 0 : i32
    %c0_i32_1 = arith.constant 0 : i32
    return %arg0, %c0_i32, %c0_i32_0 : i32, i32, i32
  }
  func.func @transform_2(%arg0: i32) -> (i32, i32, i32) {
    %c0_i32 = arith.constant 0 : i32
    %c0_i32_0 = arith.constant 0 : i32
    %c0_i32_1 = arith.constant 0 : i32
    return %arg0, %c0_i32, %c0_i32_0 : i32, i32, i32
  }
  func.func @transform_3(%arg0: i32) -> (i32, i32, i32) {
    %c0_i32 = arith.constant 0 : i32
    %c0_i32_0 = arith.constant 0 : i32
    %c0_i32_1 = arith.constant 0 : i32
    return %arg0, %c0_i32, %c0_i32_0 : i32, i32, i32
  }
  func.func @transform_4(%arg0: i32) -> (i32, i32) {
    %c0_i32 = arith.constant 0 : i32
    %c0_i32_0 = arith.constant 0 : i32
    %c0_i32_1 = arith.constant 0 : i32
    return %c0_i32, %c0_i32_0 : i32, i32
  }
  func.func @transform_5(%arg0: i32) -> (i32, i32) {
    %c0_i32 = arith.constant 0 : i32
    %c0_i32_0 = arith.constant 0 : i32
    %c0_i32_1 = arith.constant 0 : i32
    return %c0_i32, %c0_i32_0 : i32, i32
  }
  func.func @transform_6(%arg0: i32) -> (i32, i32) {
    %c0_i32 = arith.constant 0 : i32
    %c0_i32_0 = arith.constant 0 : i32
    %c0_i32_1 = arith.constant 0 : i32
    return %c0_i32, %c0_i32_0 : i32, i32
  }
  func.func @transform_7(%arg0: i32) -> (i32, i32) {
    %c0_i32 = arith.constant 0 : i32
    %c0_i32_0 = arith.constant 0 : i32
    %c0_i32_1 = arith.constant 0 : i32
    return %c0_i32, %c0_i32_0 : i32, i32
  }
  func.func @transform_8(%arg0: i32) -> (i32, i32) {
    %c0_i32 = arith.constant 0 : i32
    %c0_i32_0 = arith.constant 0 : i32
    %c0_i32_1 = arith.constant 0 : i32
    return %c0_i32, %c0_i32_0 : i32, i32
  }
  func.func @transform_9(%arg0: i32) -> (i32, i32) {
    %c0_i32 = arith.constant 0 : i32
    %c0_i32_0 = arith.constant 0 : i32
    %c0_i32_1 = arith.constant 0 : i32
    return %c0_i32, %c0_i32_0 : i32, i32
  }
  func.func @transform_10(%arg0: i32) -> (i32, i32) {
    %c0_i32 = arith.constant 0 : i32
    %c0_i32_0 = arith.constant 0 : i32
    %c0_i32_1 = arith.constant 0 : i32
    return %c0_i32, %c0_i32_0 : i32, i32
  }
  func.func @transform_11(%arg0: i32) -> (i32, i32) {
    %c0_i32 = arith.constant 0 : i32
    %c0_i32_0 = arith.constant 0 : i32
    %c0_i32_1 = arith.constant 0 : i32
    return %c0_i32, %c0_i32_0 : i32, i32
  }
  func.func @transform_12(%arg0: i32) -> (i32, i32) {
    %c0_i32 = arith.constant 0 : i32
    %c0_i32_0 = arith.constant 0 : i32
    %c0_i32_1 = arith.constant 0 : i32
    return %c0_i32, %c0_i32_0 : i32, i32
  }
  func.func @transform_13(%arg0: i32) -> (i32, i32) {
    %c0_i32 = arith.constant 0 : i32
    %c0_i32_0 = arith.constant 0 : i32
    %c0_i32_1 = arith.constant 0 : i32
    return %c0_i32, %c0_i32_0 : i32, i32
  }
  func.func @transform_14(%arg0: i32) -> (i32, i32) {
    %c0_i32 = arith.constant 0 : i32
    %c0_i32_0 = arith.constant 0 : i32
    %c0_i32_1 = arith.constant 0 : i32
    return %c0_i32, %c0_i32_0 : i32, i32
  }
  func.func @transform_15(%arg0: i32) -> (i32, i32) {
    %c0_i32 = arith.constant 0 : i32
    %c0_i32_0 = arith.constant 0 : i32
    %c0_i32_1 = arith.constant 0 : i32
    return %c0_i32, %c0_i32_0 : i32, i32
  }
  func.func @transform_16(%arg0: i32) -> (i32, i32) {
    %c0_i32 = arith.constant 0 : i32
    %c0_i32_0 = arith.constant 0 : i32
    %c0_i32_1 = arith.constant 0 : i32
    return %c0_i32, %c0_i32_0 : i32, i32
  }
  func.func @transform_17(%arg0: i32) -> (i32, i32, i32) {
    %c0_i32 = arith.constant 0 : i32
    %c0_i32_0 = arith.constant 0 : i32
    %c0_i32_1 = arith.constant 0 : i32
    return %arg0, %c0_i32, %c0_i32_0 : i32, i32, i32
  }
  func.func @transform_18(%arg0: i32) -> (i32, i32, i32, i32) {
    %c0_i32 = arith.constant 0 : i32
    %c0_i32_0 = arith.constant 0 : i32
    %c0_i32_1 = arith.constant 0 : i32
    %c0_i32_2 = arith.constant 0 : i32
    return %c0_i32, %arg0, %c0_i32_0, %c0_i32_1 : i32, i32, i32, i32
  }
}

</mosaic_0001>

<llo_original>
// kernel: graph_att_multihead_basic.1
$region0: #{graph_att_multihead_basic.1}
  #allocation0 [shape = 'u32[]', space=smem, size = 0x4, offset = 0x4, fixed_abs, tag = 'smem constant byte address 0x4 - core index']
  #allocation1 [shape = 'u32[144,128]{1,0:T(1,128)}', space=vmem, size = 0x12000, scoped, tag = 'internal scratch']
  %s0 = inlined_call_operand.vmem [shape: f32[2,8,32], index: 0, kind: input, shape index: {}]
  %s1 = inlined_call_operand.vmem [shape: f32[2,8,32], index: 1, kind: input, shape index: {}]
  %s2 = inlined_call_operand.vmem [shape: f32[2,8,32], index: 2, kind: input, shape index: {}]
  %s3 = inlined_call_operand.vmem [shape: f32[2,8,8], index: 3, kind: input, shape index: {}]
  %s4 = inlined_call_operand.vmem [shape: f32[32,32], index: 4, kind: input, shape index: {}]
  %s5 = inlined_call_operand.vmem [shape: f32[1,32], index: 5, kind: input, shape index: {}]
  %s6 = inlined_call_operand.vmem [shape: f32[32,32], index: 6, kind: input, shape index: {}]
  %s7 = inlined_call_operand.vmem [shape: f32[1,32], index: 7, kind: input, shape index: {}]
  %s8 = inlined_call_operand.vmem [shape: f32[32,32], index: 8, kind: input, shape index: {}]
  %s9 = inlined_call_operand.vmem [shape: f32[1,32], index: 9, kind: input, shape index: {}]
  %s10 = inlined_call_operand.vmem [shape: f32[32,32], index: 10, kind: input, shape index: {}]
  %s11 = inlined_call_operand.vmem [shape: f32[1,32], index: 11, kind: input, shape index: {}]
  %s12 = inlined_call_operand.vmem [shape: f32[32,32], index: 12, kind: input, shape index: {}]
  %s13 = inlined_call_operand.vmem [shape: f32[32,32], index: 13, kind: input, shape index: {}]
  %s14 = inlined_call_operand.vmem [shape: f32[1,32], index: 14, kind: input, shape index: {}]
  %s15 = inlined_call_operand.vmem [shape: f32[1,32], index: 15, kind: input, shape index: {}]
  %s16 = inlined_call_operand.vmem [shape: f32[1,32], index: 16, kind: input, shape index: {}]
  %s17 = inlined_call_operand.hbm [shape: f32[2,8,32], index: 17, kind: output, shape index: {0}]
  %s18 = inlined_call_operand.hbm [shape: f32[4,2,8,8], index: 18, kind: output, shape index: {1}]
  %19 = xla_tuple %s17, %s18
  %s20 = sld [smem:[#allocation0]]
  $region109: #{graph_att_multihead_basic.1} parent=0
    _
  %s22 = ssub.s32 1, %s20
  %s23 = scalar_select 0, %s22, %s20
  $region1: #{graph_att_multihead_basic.1} parent=0
    #allocation2 [shape = 'u8[8192]{0}', space=vmem, size = 0x2000, scoped, tag = 'output window, operand 0']
    #allocation3 [shape = 's32[2]{0}', space=sflag, size = 0x8, scoped, tag = 'scoped memory for graph_att_multihead_basic.1']
    #allocation4 [shape = 'u8[32768]{0}', space=vmem, size = 0x8000, scoped, tag = 'output window, operand 1']
    #allocation5 [shape = 's32[2]{0}', space=sflag, size = 0x8, scoped, tag = 'scoped memory for graph_att_multihead_basic.1']
    %24 = vsyncpa [#allocation3], 0
    %s25 = scalar_lea.sflag [#allocation3], 1
    %26 = vsyncpa %s25, 0
    %27 = vsyncpa [#allocation5], 0
    %s28 = scalar_lea.sflag [#allocation5], 1
    %29 = vsyncpa %s28, 0
    loop: start=0, step=1, limit=4
    $region2: #{graph_att_multihead_basic.1} parent=1 // loop_pre_header
      _
    $region3: #{graph_att_multihead_basic.1} parent=1 // loop_header
      %s31 = sphi 0, %s35
      %p32 = scmp.ge.s32.totalorder %s31, 4
      %s41 = sphi 0, %s43
      %s44 = sphi 0, %s41
      %s45 = sphi 0, %s44
      %s61 = sphi 0, %s45
      %s67 = sphi 0, %s69
      %s70 = sphi 0, %s67
      %s71 = sphi 0, %s70
      %s87 = sphi 0, %s71
      %s93 = sphi 0, %s95
      %s96 = sphi 0, %s93
      %s97 = sphi 0, %s96
      %s113 = sphi 0, %s97
      %s119 = sphi 0, %s121
      %s122 = sphi 0, %s119
      %s123 = sphi 0, %s122
      %s139 = sphi 0, %s123
      %s143 = sphi 0, %s143
      %s145 = sphi 0, %s143
      %s146 = sphi 0, %s145
      %s160 = sphi 0, %s146
      %s164 = sphi 0, %s164
      %s166 = sphi 0, %s164
      %s167 = sphi 0, %s166
      %s181 = sphi 0, %s167
      %s185 = sphi 0, %s185
      %s187 = sphi 0, %s185
      %s188 = sphi 0, %s187
      %s202 = sphi 0, %s188
      %s206 = sphi 0, %s206
      %s208 = sphi 0, %s206
      %s209 = sphi 0, %s208
      %s223 = sphi 0, %s209
      %s227 = sphi 0, %s227
      %s229 = sphi 0, %s227
      %s230 = sphi 0, %s229
      %s244 = sphi 0, %s230
      %s248 = sphi 0, %s248
      %s250 = sphi 0, %s248
      %s251 = sphi 0, %s250
      %s265 = sphi 0, %s251
      %s269 = sphi 0, %s269
      %s271 = sphi 0, %s269
      %s272 = sphi 0, %s271
      %s286 = sphi 0, %s272
      %s290 = sphi 0, %s290
      %s292 = sphi 0, %s290
      %s293 = sphi 0, %s292
      %s307 = sphi 0, %s293
      %s311 = sphi 0, %s311
      %s313 = sphi 0, %s311
      %s314 = sphi 0, %s313
      %s328 = sphi 0, %s314
      %s332 = sphi 0, %s332
      %s334 = sphi 0, %s332
      %s335 = sphi 0, %s334
      %s349 = sphi 0, %s335
      %s353 = sphi 0, %s353
      %s355 = sphi 0, %s353
      %s356 = sphi 0, %s355
      %s370 = sphi 0, %s356
      %s374 = sphi 0, %s374
      %s376 = sphi 0, %s374
      %s377 = sphi 0, %s376
      %s391 = sphi 0, %s377
      %s395 = sphi 0, %s395
      %s397 = sphi 0, %s395
      %s398 = sphi 0, %s397
      %s412 = sphi 0, %s398
      %s418 = sphi 0, %s420
      %s421 = sphi 0, %s418
      %s422 = sphi 0, %s421
      %s438 = sphi 0, %s422
      %s444 = sphi 0, %s446
      %s447 = sphi 0, %s444
      %s448 = sphi 0, %s447
      %s464 = sphi 0, %s448
    $region4: #{graph_att_multihead_basic.1} parent=1 // loop_header_branch
      %34 = sbr.rel (%p32) target = $region8
    $region5: #{graph_att_multihead_basic.1} parent=1 // loop_body
      %s36 = ssub.s32 %s31, 1
      %s37 = ssub.s32 %s31, 2
      %s38 = sadd.s32 %s31, 1
      %s39 = ssub.s32 %s31, %s38
      %p40 = scmp.eq.s32.totalorder %s39, 0
      %s42 = sadd.s32 %s41, 1
      %s43 = scalar_select %p40, %s41, %s42
      %p46 = pneg %p40
      %p47 = scmp.eq.s32.totalorder %s31, 1
      %p48 = por %p46, %p47
      %p49 = scmp.ne.s32.totalorder %s41, %s44
      %p50 = scmp.eq.s32.totalorder %s31, 0
      %p51 = por %p49, %p50
      %p52 = scmp.ne.s32.totalorder %s41, %s44
      %p53 = scmp.eq.s32.totalorder %s36, 1
      %p54 = por %p52, %p53
      %p55 = scmp.ne.s32.totalorder %s44, %s45
      %p56 = scmp.eq.s32.totalorder %s36, 0
      %p57 = por %p55, %p56
      %p58 = scmp.ne.s32.totalorder %s44, %s45
      %p59 = scmp.eq.s32.totalorder %s37, 1
      %p60 = por %p58, %p59
      %p62 = scmp.ne.s32.totalorder %s45, %s61
      %p63 = scmp.eq.s32.totalorder %s37, 0
      %p64 = por %p62, %p63
      %s65 = ssub.s32 %s31, %s38
      %p66 = scmp.eq.s32.totalorder %s65, 0
      %s68 = sadd.s32 %s67, 1
      %s69 = scalar_select %p66, %s67, %s68
      %p72 = pneg %p66
      %p73 = scmp.eq.s32.totalorder %s31, 1
      %p74 = por %p72, %p73
      %p75 = scmp.ne.s32.totalorder %s67, %s70
      %p76 = scmp.eq.s32.totalorder %s31, 0
      %p77 = por %p75, %p76
      %p78 = scmp.ne.s32.totalorder %s67, %s70
      %p79 = scmp.eq.s32.totalorder %s36, 1
      %p80 = por %p78, %p79
      %p81 = scmp.ne.s32.totalorder %s70, %s71
      %p82 = scmp.eq.s32.totalorder %s36, 0
      %p83 = por %p81, %p82
      %p84 = scmp.ne.s32.totalorder %s70, %s71
      %p85 = scmp.eq.s32.totalorder %s37, 1
      %p86 = por %p84, %p85
      %p88 = scmp.ne.s32.totalorder %s71, %s87
      %p89 = scmp.eq.s32.totalorder %s37, 0
      %p90 = por %p88, %p89
      %s91 = ssub.s32 %s31, %s38
      %p92 = scmp.eq.s32.totalorder %s91, 0
      %s94 = sadd.s32 %s93, 1
      %s95 = scalar_select %p92, %s93, %s94
      %p98 = pneg %p92
      %p99 = scmp.eq.s32.totalorder %s31, 1
      %p100 = por %p98, %p99
      %p101 = scmp.ne.s32.totalorder %s93, %s96
      %p102 = scmp.eq.s32.totalorder %s31, 0
      %p103 = por %p101, %p102
      %p104 = scmp.ne.s32.totalorder %s93, %s96
      %p105 = scmp.eq.s32.totalorder %s36, 1
      %p106 = por %p104, %p105
      %p107 = scmp.ne.s32.totalorder %s96, %s97
      %p108 = scmp.eq.s32.totalorder %s36, 0
      %p109 = por %p107, %p108
      %p110 = scmp.ne.s32.totalorder %s96, %s97
      %p111 = scmp.eq.s32.totalorder %s37, 1
      %p112 = por %p110, %p111
      %p114 = scmp.ne.s32.totalorder %s97, %s113
      %p115 = scmp.eq.s32.totalorder %s37, 0
      %p116 = por %p114, %p115
      %s117 = ssub.s32 %s31, %s38
      %p118 = scmp.eq.s32.totalorder %s117, 0
      %s120 = sadd.s32 %s119, 1
      %s121 = scalar_select %p118, %s119, %s120
      %p124 = pneg %p118
      %p125 = scmp.eq.s32.totalorder %s31, 1
      %p126 = por %p124, %p125
      %p127 = scmp.ne.s32.totalorder %s119, %s122
      %p128 = scmp.eq.s32.totalorder %s31, 0
      %p129 = por %p127, %p128
      %p130 = scmp.ne.s32.totalorder %s119, %s122
      %p131 = scmp.eq.s32.totalorder %s36, 1
      %p132 = por %p130, %p131
      %p133 = scmp.ne.s32.totalorder %s122, %s123
      %p134 = scmp.eq.s32.totalorder %s36, 0
      %p135 = por %p133, %p134
      %p136 = scmp.ne.s32.totalorder %s122, %s123
      %p137 = scmp.eq.s32.totalorder %s37, 1
      %p138 = por %p136, %p137
      %p140 = scmp.ne.s32.totalorder %s123, %s139
      %p141 = scmp.eq.s32.totalorder %s37, 0
      %p142 = por %p140, %p141
      %s144 = sadd.s32 %s143, 1
      %p147 = scmp.eq.s32.totalorder %s31, 1
      %p148 = scmp.ne.s32.totalorder %s143, %s145
      %p149 = scmp.eq.s32.totalorder %s31, 0
      %p150 = por %p148, %p149
      %p151 = scmp.ne.s32.totalorder %s143, %s145
      %p152 = scmp.eq.s32.totalorder %s36, 1
      %p153 = por %p151, %p152
      %p154 = scmp.ne.s32.totalorder %s145, %s146
      %p155 = scmp.eq.s32.totalorder %s36, 0
      %p156 = por %p154, %p155
      %p157 = scmp.ne.s32.totalorder %s145, %s146
      %p158 = scmp.eq.s32.totalorder %s37, 1
      %p159 = por %p157, %p158
      %p161 = scmp.ne.s32.totalorder %s146, %s160
      %p162 = scmp.eq.s32.totalorder %s37, 0
      %p163 = por %p161, %p162
      %s165 = sadd.s32 %s164, 1
      %p168 = scmp.eq.s32.totalorder %s31, 1
      %p169 = scmp.ne.s32.totalorder %s164, %s166
      %p170 = scmp.eq.s32.totalorder %s31, 0
      %p171 = por %p169, %p170
      %p172 = scmp.ne.s32.totalorder %s164, %s166
      %p173 = scmp.eq.s32.totalorder %s36, 1
      %p174 = por %p172, %p173
      %p175 = scmp.ne.s32.totalorder %s166, %s167
      %p176 = scmp.eq.s32.totalorder %s36, 0
      %p177 = por %p175, %p176
      %p178 = scmp.ne.s32.totalorder %s166, %s167
      %p179 = scmp.eq.s32.totalorder %s37, 1
      %p180 = por %p178, %p179
      %p182 = scmp.ne.s32.totalorder %s167, %s181
      %p183 = scmp.eq.s32.totalorder %s37, 0
      %p184 = por %p182, %p183
      %s186 = sadd.s32 %s185, 1
      %p189 = scmp.eq.s32.totalorder %s31, 1
      %p190 = scmp.ne.s32.totalorder %s185, %s187
      %p191 = scmp.eq.s32.totalorder %s31, 0
      %p192 = por %p190, %p191
      %p193 = scmp.ne.s32.totalorder %s185, %s187
      %p194 = scmp.eq.s32.totalorder %s36, 1
      %p195 = por %p193, %p194
      %p196 = scmp.ne.s32.totalorder %s187, %s188
      %p197 = scmp.eq.s32.totalorder %s36, 0
      %p198 = por %p196, %p197
      %p199 = scmp.ne.s32.totalorder %s187, %s188
      %p200 = scmp.eq.s32.totalorder %s37, 1
      %p201 = por %p199, %p200
      %p203 = scmp.ne.s32.totalorder %s188, %s202
      %p204 = scmp.eq.s32.totalorder %s37, 0
      %p205 = por %p203, %p204
      %s207 = sadd.s32 %s206, 1
      %p210 = scmp.eq.s32.totalorder %s31, 1
      %p211 = scmp.ne.s32.totalorder %s206, %s208
      %p212 = scmp.eq.s32.totalorder %s31, 0
      %p213 = por %p211, %p212
      %p214 = scmp.ne.s32.totalorder %s206, %s208
      %p215 = scmp.eq.s32.totalorder %s36, 1
      %p216 = por %p214, %p215
      %p217 = scmp.ne.s32.totalorder %s208, %s209
      %p218 = scmp.eq.s32.totalorder %s36, 0
      %p219 = por %p217, %p218
      %p220 = scmp.ne.s32.totalorder %s208, %s209
      %p221 = scmp.eq.s32.totalorder %s37, 1
      %p222 = por %p220, %p221
      %p224 = scmp.ne.s32.totalorder %s209, %s223
      %p225 = scmp.eq.s32.totalorder %s37, 0
      %p226 = por %p224, %p225
      %s228 = sadd.s32 %s227, 1
      %p231 = scmp.eq.s32.totalorder %s31, 1
      %p232 = scmp.ne.s32.totalorder %s227, %s229
      %p233 = scmp.eq.s32.totalorder %s31, 0
      %p234 = por %p232, %p233
      %p235 = scmp.ne.s32.totalorder %s227, %s229
      %p236 = scmp.eq.s32.totalorder %s36, 1
      %p237 = por %p235, %p236
      %p238 = scmp.ne.s32.totalorder %s229, %s230
      %p239 = scmp.eq.s32.totalorder %s36, 0
      %p240 = por %p238, %p239
      %p241 = scmp.ne.s32.totalorder %s229, %s230
      %p242 = scmp.eq.s32.totalorder %s37, 1
      %p243 = por %p241, %p242
      %p245 = scmp.ne.s32.totalorder %s230, %s244
      %p246 = scmp.eq.s32.totalorder %s37, 0
      %p247 = por %p245, %p246
      %s249 = sadd.s32 %s248, 1
      %p252 = scmp.eq.s32.totalorder %s31, 1
      %p253 = scmp.ne.s32.totalorder %s248, %s250
      %p254 = scmp.eq.s32.totalorder %s31, 0
      %p255 = por %p253, %p254
      %p256 = scmp.ne.s32.totalorder %s248, %s250
      %p257 = scmp.eq.s32.totalorder %s36, 1
      %p258 = por %p256, %p257
      %p259 = scmp.ne.s32.totalorder %s250, %s251
      %p260 = scmp.eq.s32.totalorder %s36, 0
      %p261 = por %p259, %p260
      %p262 = scmp.ne.s32.totalorder %s250, %s251
      %p263 = scmp.eq.s32.totalorder %s37, 1
      %p264 = por %p262, %p263
      %p266 = scmp.ne.s32.totalorder %s251, %s265
      %p267 = scmp.eq.s32.totalorder %s37, 0
      %p268 = por %p266, %p267
      %s270 = sadd.s32 %s269, 1
      %p273 = scmp.eq.s32.totalorder %s31, 1
      %p274 = scmp.ne.s32.totalorder %s269, %s271
      %p275 = scmp.eq.s32.totalorder %s31, 0
      %p276 = por %p274, %p275
      %p277 = scmp.ne.s32.totalorder %s269, %s271
      %p278 = scmp.eq.s32.totalorder %s36, 1
      %p279 = por %p277, %p278
      %p280 = scmp.ne.s32.totalorder %s271, %s272
      %p281 = scmp.eq.s32.totalorder %s36, 0
      %p282 = por %p280, %p281
      %p283 = scmp.ne.s32.totalorder %s271, %s272
      %p284 = scmp.eq.s32.totalorder %s37, 1
      %p285 = por %p283, %p284
      %p287 = scmp.ne.s32.totalorder %s272, %s286
      %p288 = scmp.eq.s32.totalorder %s37, 0
      %p289 = por %p287, %p288
      %s291 = sadd.s32 %s290, 1
      %p294 = scmp.eq.s32.totalorder %s31, 1
      %p295 = scmp.ne.s32.totalorder %s290, %s292
      %p296 = scmp.eq.s32.totalorder %s31, 0
      %p297 = por %p295, %p296
      %p298 = scmp.ne.s32.totalorder %s290, %s292
      %p299 = scmp.eq.s32.totalorder %s36, 1
      %p300 = por %p298, %p299
      %p301 = scmp.ne.s32.totalorder %s292, %s293
      %p302 = scmp.eq.s32.totalorder %s36, 0
      %p303 = por %p301, %p302
      %p304 = scmp.ne.s32.totalorder %s292, %s293
      %p305 = scmp.eq.s32.totalorder %s37, 1
      %p306 = por %p304, %p305
      %p308 = scmp.ne.s32.totalorder %s293, %s307
      %p309 = scmp.eq.s32.totalorder %s37, 0
      %p310 = por %p308, %p309
      %s312 = sadd.s32 %s311, 1
      %p315 = scmp.eq.s32.totalorder %s31, 1
      %p316 = scmp.ne.s32.totalorder %s311, %s313
      %p317 = scmp.eq.s32.totalorder %s31, 0
      %p318 = por %p316, %p317
      %p319 = scmp.ne.s32.totalorder %s311, %s313
      %p320 = scmp.eq.s32.totalorder %s36, 1
      %p321 = por %p319, %p320
      %p322 = scmp.ne.s32.totalorder %s313, %s314
      %p323 = scmp.eq.s32.totalorder %s36, 0
      %p324 = por %p322, %p323
      %p325 = scmp.ne.s32.totalorder %s313, %s314
      %p326 = scmp.eq.s32.totalorder %s37, 1
      %p327 = por %p325, %p326
      %p329 = scmp.ne.s32.totalorder %s314, %s328
      %p330 = scmp.eq.s32.totalorder %s37, 0
      %p331 = por %p329, %p330
      %s333 = sadd.s32 %s332, 1
      %p336 = scmp.eq.s32.totalorder %s31, 1
      %p337 = scmp.ne.s32.totalorder %s332, %s334
      %p338 = scmp.eq.s32.totalorder %s31, 0
      %p339 = por %p337, %p338
      %p340 = scmp.ne.s32.totalorder %s332, %s334
      %p341 = scmp.eq.s32.totalorder %s36, 1
      %p342 = por %p340, %p341
      %p343 = scmp.ne.s32.totalorder %s334, %s335
      %p344 = scmp.eq.s32.totalorder %s36, 0
      %p345 = por %p343, %p344
      %p346 = scmp.ne.s32.totalorder %s334, %s335
      %p347 = scmp.eq.s32.totalorder %s37, 1
      %p348 = por %p346, %p347
      %p350 = scmp.ne.s32.totalorder %s335, %s349
      %p351 = scmp.eq.s32.totalorder %s37, 0
      %p352 = por %p350, %p351
      %s354 = sadd.s32 %s353, 1
      %p357 = scmp.eq.s32.totalorder %s31, 1
      %p358 = scmp.ne.s32.totalorder %s353, %s355
      %p359 = scmp.eq.s32.totalorder %s31, 0
      %p360 = por %p358, %p359
      %p361 = scmp.ne.s32.totalorder %s353, %s355
      %p362 = scmp.eq.s32.totalorder %s36, 1
      %p363 = por %p361, %p362
      %p364 = scmp.ne.s32.totalorder %s355, %s356
      %p365 = scmp.eq.s32.totalorder %s36, 0
      %p366 = por %p364, %p365
      %p367 = scmp.ne.s32.totalorder %s355, %s356
      %p368 = scmp.eq.s32.totalorder %s37, 1
      %p369 = por %p367, %p368
      %p371 = scmp.ne.s32.totalorder %s356, %s370
      %p372 = scmp.eq.s32.totalorder %s37, 0
      %p373 = por %p371, %p372
      %s375 = sadd.s32 %s374, 1
      %p378 = scmp.eq.s32.totalorder %s31, 1
      %p379 = scmp.ne.s32.totalorder %s374, %s376
      %p380 = scmp.eq.s32.totalorder %s31, 0
      %p381 = por %p379, %p380
      %p382 = scmp.ne.s32.totalorder %s374, %s376
      %p383 = scmp.eq.s32.totalorder %s36, 1
      %p384 = por %p382, %p383
      %p385 = scmp.ne.s32.totalorder %s376, %s377
      %p386 = scmp.eq.s32.totalorder %s36, 0
      %p387 = por %p385, %p386
      %p388 = scmp.ne.s32.totalorder %s376, %s377
      %p389 = scmp.eq.s32.totalorder %s37, 1
      %p390 = por %p388, %p389
      %p392 = scmp.ne.s32.totalorder %s377, %s391
      %p393 = scmp.eq.s32.totalorder %s37, 0
      %p394 = por %p392, %p393
      %s396 = sadd.s32 %s395, 1
      %p399 = scmp.eq.s32.totalorder %s31, 1
      %p400 = scmp.ne.s32.totalorder %s395, %s397
      %p401 = scmp.eq.s32.totalorder %s31, 0
      %p402 = por %p400, %p401
      %p403 = scmp.ne.s32.totalorder %s395, %s397
      %p404 = scmp.eq.s32.totalorder %s36, 1
      %p405 = por %p403, %p404
      %p406 = scmp.ne.s32.totalorder %s397, %s398
      %p407 = scmp.eq.s32.totalorder %s36, 0
      %p408 = por %p406, %p407
      %p409 = scmp.ne.s32.totalorder %s397, %s398
      %p410 = scmp.eq.s32.totalorder %s37, 1
      %p411 = por %p409, %p410
      %p413 = scmp.ne.s32.totalorder %s398, %s412
      %p414 = scmp.eq.s32.totalorder %s37, 0
      %p415 = por %p413, %p414
      %s416 = ssub.s32 %s31, %s38
      %p417 = scmp.eq.s32.totalorder %s416, 0
      %s419 = sadd.s32 %s418, 1
      %s420 = scalar_select %p417, %s418, %s419
      %p423 = pneg %p417
      %p424 = scmp.eq.s32.totalorder %s31, 1
      %p425 = por %p423, %p424
      %p426 = scmp.ne.s32.totalorder %s418, %s421
      %p427 = scmp.eq.s32.totalorder %s31, 0
      %p428 = por %p426, %p427
      %p429 = scmp.ne.s32.totalorder %s418, %s421
      %p430 = scmp.eq.s32.totalorder %s36, 1
      %p431 = por %p429, %p430
      %p432 = scmp.ne.s32.totalorder %s421, %s422
      %p433 = scmp.eq.s32.totalorder %s36, 0
      %p434 = por %p432, %p433
      %p435 = scmp.ne.s32.totalorder %s421, %s422
      %p436 = scmp.eq.s32.totalorder %s37, 1
      %p437 = por %p435, %p436
      %p439 = scmp.ne.s32.totalorder %s422, %s438
      %p440 = scmp.eq.s32.totalorder %s37, 0
      %p441 = por %p439, %p440
      %s442 = ssub.s32 %s31, %s38
      %p443 = scmp.eq.s32.totalorder %s442, 0
      %s445 = sadd.s32 %s444, 1
      %s446 = scalar_select %p443, %s444, %s445
      %p449 = pneg %p443
      %p450 = scmp.eq.s32.totalorder %s31, 1
      %p451 = por %p449, %p450
      %p452 = scmp.ne.s32.totalorder %s444, %s447
      %p453 = scmp.eq.s32.totalorder %s31, 0
      %p454 = por %p452, %p453
      %p455 = scmp.ne.s32.totalorder %s444, %s447
      %p456 = scmp.eq.s32.totalorder %s36, 1
      %p457 = por %p455, %p456
      %p458 = scmp.ne.s32.totalorder %s447, %s448
      %p459 = scmp.eq.s32.totalorder %s36, 0
      %p460 = por %p458, %p459
      %p461 = scmp.ne.s32.totalorder %s447, %s448
      %p462 = scmp.eq.s32.totalorder %s37, 1
      %p463 = por %p461, %p462
      %p465 = scmp.ne.s32.totalorder %s448, %s464
      %p466 = scmp.eq.s32.totalorder %s37, 0
      %p467 = por %p465, %p466
      %p468 = scmp.le.s32.totalorder 1, %s31
      %p469 = scmp.lt.s32.totalorder %s31, 3
      %p470 = pnand %p468, %p469
      %p471 = pneg %p470
      // Predicated region
      $region9: #{graph_att_multihead_basic.1} parent=5 // pred_check
        _
      $region10: #{graph_att_multihead_basic.1} parent=5 // pred_check_branch
        %473 = sbr.rel (%p470) target = $region12
      $region11: #{graph_att_multihead_basic.1} parent=5 // pred_region
        %s474 = ssub.s32 %s31, 1
        // Predicated region
        $region13: #{graph_att_multihead_basic.1} parent=11 // pred_check
          %p475 = pneg %p156
        $region14: #{graph_att_multihead_basic.1} parent=11 // pred_check_branch
          %477 = sbr.rel (%p475) target = $region16
        $region15: #{graph_att_multihead_basic.1} parent=11 // pred_region
          _
        $region16: #{graph_att_multihead_basic.1} parent=11 // pred_fallthru
          _
        // Predicated region
        $region17: #{graph_att_multihead_basic.1} parent=11 // pred_check
          %p478 = pneg %p177
        $region18: #{graph_att_multihead_basic.1} parent=11 // pred_check_branch
          %480 = sbr.rel (%p478) target = $region20
        $region19: #{graph_att_multihead_basic.1} parent=11 // pred_region
          _
        $region20: #{graph_att_multihead_basic.1} parent=11 // pred_fallthru
          _
        // Predicated region
        $region21: #{graph_att_multihead_basic.1} parent=11 // pred_check
          %p481 = pneg %p198
        $region22: #{graph_att_multihead_basic.1} parent=11 // pred_check_branch
          %483 = sbr.rel (%p481) target = $region24
        $region23: #{graph_att_multihead_basic.1} parent=11 // pred_region
          _
        $region24: #{graph_att_multihead_basic.1} parent=11 // pred_fallthru
          _
        // Predicated region
        $region25: #{graph_att_multihead_basic.1} parent=11 // pred_check
          %p484 = pneg %p219
        $region26: #{graph_att_multihead_basic.1} parent=11 // pred_check_branch
          %486 = sbr.rel (%p484) target = $region28
        $region27: #{graph_att_multihead_basic.1} parent=11 // pred_region
          _
        $region28: #{graph_att_multihead_basic.1} parent=11 // pred_fallthru
          _
        // Predicated region
        $region29: #{graph_att_multihead_basic.1} parent=11 // pred_check
          %p487 = pneg %p240
        $region30: #{graph_att_multihead_basic.1} parent=11 // pred_check_branch
          %489 = sbr.rel (%p487) target = $region32
        $region31: #{graph_att_multihead_basic.1} parent=11 // pred_region
          _
        $region32: #{graph_att_multihead_basic.1} parent=11 // pred_fallthru
          _
        // Predicated region
        $region33: #{graph_att_multihead_basic.1} parent=11 // pred_check
          %p490 = pneg %p261
        $region34: #{graph_att_multihead_basic.1} parent=11 // pred_check_branch
          %492 = sbr.rel (%p490) target = $region36
        $region35: #{graph_att_multihead_basic.1} parent=11 // pred_region
          _
        $region36: #{graph_att_multihead_basic.1} parent=11 // pred_fallthru
          _
        // Predicated region
        $region37: #{graph_att_multihead_basic.1} parent=11 // pred_check
          %p493 = pneg %p282
        $region38: #{graph_att_multihead_basic.1} parent=11 // pred_check_branch
          %495 = sbr.rel (%p493) target = $region40
        $region39: #{graph_att_multihead_basic.1} parent=11 // pred_region
          _
        $region40: #{graph_att_multihead_basic.1} parent=11 // pred_fallthru
          _
        // Predicated region
        $region41: #{graph_att_multihead_basic.1} parent=11 // pred_check
          %p496 = pneg %p303
        $region42: #{graph_att_multihead_basic.1} parent=11 // pred_check_branch
          %498 = sbr.rel (%p496) target = $region44
        $region43: #{graph_att_multihead_basic.1} parent=11 // pred_region
          _
        $region44: #{graph_att_multihead_basic.1} parent=11 // pred_fallthru
          _
        // Predicated region
        $region45: #{graph_att_multihead_basic.1} parent=11 // pred_check
          %p499 = pneg %p324
        $region46: #{graph_att_multihead_basic.1} parent=11 // pred_check_branch
          %501 = sbr.rel (%p499) target = $region48
        $region47: #{graph_att_multihead_basic.1} parent=11 // pred_region
          _
        $region48: #{graph_att_multihead_basic.1} parent=11 // pred_fallthru
          _
        // Predicated region
        $region49: #{graph_att_multihead_basic.1} parent=11 // pred_check
          %p502 = pneg %p345
        $region50: #{graph_att_multihead_basic.1} parent=11 // pred_check_branch
          %504 = sbr.rel (%p502) target = $region52
        $region51: #{graph_att_multihead_basic.1} parent=11 // pred_region
          _
        $region52: #{graph_att_multihead_basic.1} parent=11 // pred_fallthru
          _
        // Predicated region
        $region53: #{graph_att_multihead_basic.1} parent=11 // pred_check
          %p505 = pneg %p366
        $region54: #{graph_att_multihead_basic.1} parent=11 // pred_check_branch
          %507 = sbr.rel (%p505) target = $region56
        $region55: #{graph_att_multihead_basic.1} parent=11 // pred_region
          _
        $region56: #{graph_att_multihead_basic.1} parent=11 // pred_fallthru
          _
        // Predicated region
        $region57: #{graph_att_multihead_basic.1} parent=11 // pred_check
          %p508 = pneg %p387
        $region58: #{graph_att_multihead_basic.1} parent=11 // pred_check_branch
          %510 = sbr.rel (%p508) target = $region60
        $region59: #{graph_att_multihead_basic.1} parent=11 // pred_region
          _
        $region60: #{graph_att_multihead_basic.1} parent=11 // pred_fallthru
          _
        // Predicated region
        $region61: #{graph_att_multihead_basic.1} parent=11 // pred_check
          %p511 = pneg %p408
        $region62: #{graph_att_multihead_basic.1} parent=11 // pred_check_branch
          %513 = sbr.rel (%p511) target = $region64
        $region63: #{graph_att_multihead_basic.1} parent=11 // pred_region
          _
        $region64: #{graph_att_multihead_basic.1} parent=11 // pred_fallthru
          _
      $region12: #{graph_att_multihead_basic.1} parent=5 // pred_fallthru
        _
      %p514 = scmp.lt.s32.totalorder %s31, 2
      // Predicated region
      $region65: #{graph_att_multihead_basic.1} parent=5 // pred_check
        %p515 = pneg %p514
      $region66: #{graph_att_multihead_basic.1} parent=5 // pred_check_branch
        %517 = sbr.rel (%p515) target = $region68
      $region67: #{graph_att_multihead_basic.1} parent=5 // pred_region
        // Predicated region
        $region69: #{graph_att_multihead_basic.1} parent=67 // pred_check
          %p518 = pneg %p51
        $region70: #{graph_att_multihead_basic.1} parent=67 // pred_check_branch
          %520 = sbr.rel (%p518) target = $region72
        $region71: #{graph_att_multihead_basic.1} parent=67 // pred_region
          %p521 = scmp.lt.s32.totalorder %s31, 1
          %s522 = scalar_select %p521, %s31, 1
          %s523 = smul.addr %s522, 8
          %s524 = scalar_lea.vmem %s0, %s523
        $region72: #{graph_att_multihead_basic.1} parent=67 // pred_fallthru
          _
        // Predicated region
        $region73: #{graph_att_multihead_basic.1} parent=67 // pred_check
          %p525 = pneg %p77
        $region74: #{graph_att_multihead_basic.1} parent=67 // pred_check_branch
          %527 = sbr.rel (%p525) target = $region76
        $region75: #{graph_att_multihead_basic.1} parent=67 // pred_region
          %p528 = scmp.lt.s32.totalorder %s31, 1
          %s529 = scalar_select %p528, %s31, 1
          %s530 = smul.addr %s529, 8
          %s531 = scalar_lea.vmem %s1, %s530
        $region76: #{graph_att_multihead_basic.1} parent=67 // pred_fallthru
          _
        // Predicated region
        $region77: #{graph_att_multihead_basic.1} parent=67 // pred_check
          %p532 = pneg %p103
        $region78: #{graph_att_multihead_basic.1} parent=67 // pred_check_branch
          %534 = sbr.rel (%p532) target = $region80
        $region79: #{graph_att_multihead_basic.1} parent=67 // pred_region
          %p535 = scmp.lt.s32.totalorder %s31, 1
          %s536 = scalar_select %p535, %s31, 1
          %s537 = smul.addr %s536, 8
          %s538 = scalar_lea.vmem %s2, %s537
        $region80: #{graph_att_multihead_basic.1} parent=67 // pred_fallthru
          _
        // Predicated region
        $region81: #{graph_att_multihead_basic.1} parent=67 // pred_check
          %p539 = pneg %p129
        $region82: #{graph_att_multihead_basic.1} parent=67 // pred_check_branch
          %541 = sbr.rel (%p539) target = $region84
        $region83: #{graph_att_multihead_basic.1} parent=67 // pred_region
          %p542 = scmp.lt.s32.totalorder %s31, 1
          %s543 = scalar_select %p542, %s31, 1
          %s544 = smul.addr %s543, 8
          %s545 = scalar_lea.vmem %s3, %s544
        $region84: #{graph_att_multihead_basic.1} parent=67 // pred_fallthru
          _
      $region68: #{graph_att_multihead_basic.1} parent=5 // pred_fallthru
        _
      %p546 = scmp.le.s32.totalorder 1, %s31
      %p547 = scmp.lt.s32.totalorder %s31, 3
      %p548 = pnand %p546, %p547
      %p549 = pneg %p548
      // Predicated region
      $region85: #{graph_att_multihead_basic.1} parent=5 // pred_check
        _
      $region86: #{graph_att_multihead_basic.1} parent=5 // pred_check_branch
        %551 = sbr.rel (%p548) target = $region88
      $region87: #{graph_att_multihead_basic.1} parent=5 // pred_region
        %s552 = ssub.s32 %s31, 1
        %p553 = scmp.lt.s32.totalorder %s36, 1
        %s554 = scalar_select %p553, %s36, 1
        %s555 = smul.addr %s554, 8
        %s556 = scalar_lea.vmem %s0, %s555
        %p557 = pneg %p57
        %p558 = pneg %p54
        %p559 = scmp.lt.s32.totalorder %s36, 1
        %s560 = scalar_select %p559, %s36, 1
        %s561 = smul.addr %s560, 8
        %s562 = scalar_lea.vmem %s1, %s561
        %p563 = pneg %p83
        %p564 = pneg %p80
        %p565 = scmp.lt.s32.totalorder %s36, 1
        %s566 = scalar_select %p565, %s36, 1
        %s567 = smul.addr %s566, 8
        %s568 = scalar_lea.vmem %s2, %s567
        %p569 = pneg %p109
        %p570 = pneg %p106
        %p571 = scmp.lt.s32.totalorder %s36, 1
        %s572 = scalar_select %p571, %s36, 1
        %s573 = smul.addr %s572, 8
        %s574 = scalar_lea.vmem %s3, %s573
        %p575 = pneg %p135
        %p576 = pneg %p132
        %p577 = pneg %p156
        %p578 = pneg %p153
        %p579 = pneg %p177
        %p580 = pneg %p174
        %p581 = pneg %p198
        %p582 = pneg %p195
        %p583 = pneg %p219
        %p584 = pneg %p216
        %p585 = pneg %p240
        %p586 = pneg %p237
        %p587 = pneg %p261
        %p588 = pneg %p258
        %p589 = pneg %p282
        %p590 = pneg %p279
        %p591 = pneg %p303
        %p592 = pneg %p300
        %p593 = pneg %p324
        %p594 = pneg %p321
        %p595 = pneg %p345
        %p596 = pneg %p342
        %p597 = pneg %p366
        %p598 = pneg %p363
        %p599 = pneg %p387
        %p600 = pneg %p384
        %p601 = pneg %p408
        %p602 = pneg %p405
        %p603 = pneg %p434
        %p604 = pneg %p431
        %s605 = sand.u32 %s421, 1
        %s606 = scalar_lea.sflag [#allocation3], %s605
        %s607 = sand.u32 %s421, 1
        %s608 = smul.addr %s607, 8
        %s609 = scalar_lea.vmem [#allocation2], %s608
        %p610 = pneg %p460
        %p611 = pneg %p457
        %s612 = sand.u32 %s447, 1
        %s613 = scalar_lea.sflag [#allocation5], %s612
        %s614 = sand.u32 %s447, 1
        %s615 = smul.addr %s614, 32
        %s616 = scalar_lea.vmem [#allocation4], %s615
        %p617 = scmp.lt.s32.totalorder %s36, 1
        %s618 = scalar_select %p617, %s36, 1
        %s619 = smul.addr %s618, 8
        %s620 = scalar_lea.vmem %s0, %s619
        %p621 = scmp.lt.s32.totalorder %s36, 1
        %s622 = scalar_select %p621, %s36, 1
        %s623 = smul.addr %s622, 8
        %s624 = scalar_lea.vmem %s1, %s623
        %p625 = scmp.lt.s32.totalorder %s36, 1
        %s626 = scalar_select %p625, %s36, 1
        %s627 = smul.addr %s626, 8
        %s628 = scalar_lea.vmem %s2, %s627
        %p629 = scmp.lt.s32.totalorder %s36, 1
        %s630 = scalar_select %p629, %s36, 1
        %s631 = smul.addr %s630, 8
        %s632 = scalar_lea.vmem %s3, %s631
        %v633 = vld [vmem:[%s620] sm:$0xff]
        %v634 = vld [vmem:[%s624] sm:$0xff]
        %v635 = vld [vmem:[%s628] sm:$0xff]
        %v636 = vld [vmem:[%s4] sm:$0xff]
        %v637 = vld [vmem:[%s4 + $0x8] sm:$0xff]
        %v638 = vld [vmem:[%s4 + $0x10] sm:$0xff]
        %v639 = vld [vmem:[%s4 + $0x18] sm:$0xff]
        %v640 = vld [vmem:[%s5] sm:$0x1]
        %v642 = vlaneseq
        %v643 = vshrl.u32 %v642, 7
        %v644 = vsub.s32 0, %v643
        %v645 = vrot.slane %v640, %v644
        %vm647 = vcmask 261120
        %v649 = vsel %vm647, %v633, 0
        %v652 = vsel %vm647, %v636, 0
        %v655 = vsel %vm647, %v637, 0
        %v658 = vsel %vm647, %v638, 0
        %v661 = vsel %vm647, %v639, 0
        %663 = vmatprep.subr.mxu0 0.0
        %664 = vmatpush1.xpose.msra.mxu0 %v652
        %665 = vmatprep.subr.mxu0 0.0
        %666 = vmatpush1.xpose.msra.mxu0 %v655
        %667 = vmatprep.subr.mxu0 0.0
        %668 = vmatpush1.xpose.msra.mxu0 %v658
        %669 = vmatprep.subr.mxu0 0.0
        %670 = vmatpush1.xpose.msra.mxu0 %v661
        %671 = vmatprep.subr.mxu0 0.0
        %672 = vmatpush1.xpose.msra.mxu0 0.0
        %673 = vmatprep.subr.mxu0 0.0
        %674 = vmatpush1.xpose.msra.mxu0 0.0
        %675 = vmatprep.subr.mxu0 0.0
        %676 = vmatpush1.xpose.msra.mxu0 0.0
        %677 = vmatprep.subr.mxu0 0.0
        %678 = vmatpush1.xpose.msra.mxu0 0.0
        %679 = vmatprep.subr.mxu0 0.0
        %680 = vmatpush1.xpose.msra.mxu0 0.0
        %681 = vmatprep.subr.mxu0 0.0
        %682 = vmatpush1.xpose.msra.mxu0 0.0
        %683 = vmatprep.subr.mxu0 0.0
        %684 = vmatpush1.xpose.msra.mxu0 0.0
        %685 = vmatprep.subr.mxu0 0.0
        %686 = vmatpush1.xpose.msra.mxu0 0.0
        %687 = vmatprep.subr.mxu0 0.0
        %688 = vmatpush1.xpose.msra.mxu0 0.0
        %689 = vmatprep.subr.mxu0 0.0
        %690 = vmatpush1.xpose.msra.mxu0 0.0
        %691 = vmatprep.subr.mxu0 0.0
        %692 = vmatpush1.xpose.msra.mxu0 0.0
        %693 = vmatprep.subr.mxu0 0.0
        %694 = vmatpush1.xpose.msra.mxu0 0.0
        %695 = vmatprep.subr.mxu0 0.0
        %696 = vmatpush1.xpose.msra.mxu0 0.0
        %697 = vmatprep.subr.mxu0 0.0
        %698 = vmatpush1.xpose.msra.mxu0 0.0
        %699 = vmatprep.subr.mxu0 0.0
        %700 = vmatpush1.xpose.msra.mxu0 0.0
        %701 = vmatprep.subr.mxu0 0.0
        %702 = vmatpush1.xpose.msra.mxu0 0.0
        %703 = vmatprep.subr.mxu0 0.0
        %704 = vmatpush1.xpose.msra.mxu0 0.0
        %705 = vmatprep.subr.mxu0 0.0
        %706 = vmatpush1.xpose.msra.mxu0 0.0
        %707 = vmatprep.subr.mxu0 0.0
        %708 = vmatpush1.xpose.msra.mxu0 0.0
        %709 = vmatprep.subr.mxu0 0.0
        %710 = vmatpush1.xpose.msra.mxu0 0.0
        %711 = vmatprep.subr.mxu0 0.0
        %712 = vmatpush1.xpose.msra.mxu0 0.0
        %713 = vmatprep.subr.mxu0 0.0
        %714 = vmatpush1.xpose.msra.mxu0 0.0
        %715 = vmatprep.subr.mxu0 0.0
        %716 = vmatpush1.xpose.msra.mxu0 0.0
        %717 = vmatprep.subr.mxu0 0.0
        %718 = vmatpush1.xpose.msra.mxu0 0.0
        %719 = vmatprep.subr.mxu0 0.0
        %720 = vmatpush1.xpose.msra.mxu0 0.0
        %721 = vmatprep.subr.mxu0 0.0
        %722 = vmatpush1.xpose.msra.mxu0 0.0
        %723 = vmatprep.subr.mxu0 0.0
        %724 = vmatpush1.xpose.msra.mxu0 0.0
        %725 = vmatprep.subr.mxu0 0.0
        %726 = vmatpush1.xpose.msra.mxu0 0.0
        %727 = vmatprep.mubr.f32.mxu0 0.0
        %728 = vmatmul.mubr.f32.gmra.mrb[0].mxu0 %v649
        %v729 = vpop.f32.mrb[0].mxu0
        %v730 = vadd.f32 %v645, %v729
        %v731 = vpop.f32.mrb[0].mxu0
        %732 = vdwg.mxu0
        %v733 = vmul.f32 %v730, 0.35355338
        %v734 = vld [vmem:[%s6] sm:$0xff]
        %v735 = vld [vmem:[%s6 + $0x8] sm:$0xff]
        %v736 = vld [vmem:[%s6 + $0x10] sm:$0xff]
        %v737 = vld [vmem:[%s6 + $0x18] sm:$0xff]
        %v738 = vld [vmem:[%s7] sm:$0x1]
        %v740 = vlaneseq
        %v741 = vshrl.u32 %v740, 7
        %v742 = vsub.s32 0, %v741
        %v743 = vrot.slane %v738, %v742
        %v746 = vsel %vm647, %v634, 0
        %v749 = vsel %vm647, %v734, 0
        %v752 = vsel %vm647, %v735, 0
        %v755 = vsel %vm647, %v736, 0
        %v758 = vsel %vm647, %v737, 0
        %760 = vmatprep.subr.mxu0 0.0
        %761 = vmatpush1.xpose.msra.mxu0 %v749
        %762 = vmatprep.subr.mxu0 0.0
        %763 = vmatpush1.xpose.msra.mxu0 %v752
        %764 = vmatprep.subr.mxu0 0.0
        %765 = vmatpush1.xpose.msra.mxu0 %v755
        %766 = vmatprep.subr.mxu0 0.0
        %767 = vmatpush1.xpose.msra.mxu0 %v758
        %768 = vmatprep.subr.mxu0 0.0
        %769 = vmatpush1.xpose.msra.mxu0 0.0
        %770 = vmatprep.subr.mxu0 0.0
        %771 = vmatpush1.xpose.msra.mxu0 0.0
        %772 = vmatprep.subr.mxu0 0.0
        %773 = vmatpush1.xpose.msra.mxu0 0.0
        %774 = vmatprep.subr.mxu0 0.0
        %775 = vmatpush1.xpose.msra.mxu0 0.0
        %776 = vmatprep.subr.mxu0 0.0
        %777 = vmatpush1.xpose.msra.mxu0 0.0
        %778 = vmatprep.subr.mxu0 0.0
        %779 = vmatpush1.xpose.msra.mxu0 0.0
        %780 = vmatprep.subr.mxu0 0.0
        %781 = vmatpush1.xpose.msra.mxu0 0.0
        %782 = vmatprep.subr.mxu0 0.0
        %783 = vmatpush1.xpose.msra.mxu0 0.0
        %784 = vmatprep.subr.mxu0 0.0
        %785 = vmatpush1.xpose.msra.mxu0 0.0
        %786 = vmatprep.subr.mxu0 0.0
        %787 = vmatpush1.xpose.msra.mxu0 0.0
        %788 = vmatprep.subr.mxu0 0.0
        %789 = vmatpush1.xpose.msra.mxu0 0.0
        %790 = vmatprep.subr.mxu0 0.0
        %791 = vmatpush1.xpose.msra.mxu0 0.0
        %792 = vmatprep.subr.mxu0 0.0
        %793 = vmatpush1.xpose.msra.mxu0 0.0
        %794 = vmatprep.subr.mxu0 0.0
        %795 = vmatpush1.xpose.msra.mxu0 0.0
        %796 = vmatprep.subr.mxu0 0.0
        %797 = vmatpush1.xpose.msra.mxu0 0.0
        %798 = vmatprep.subr.mxu0 0.0
        %799 = vmatpush1.xpose.msra.mxu0 0.0
        %800 = vmatprep.subr.mxu0 0.0
        %801 = vmatpush1.xpose.msra.mxu0 0.0
        %802 = vmatprep.subr.mxu0 0.0
        %803 = vmatpush1.xpose.msra.mxu0 0.0
        %804 = vmatprep.subr.mxu0 0.0
        %805 = vmatpush1.xpose.msra.mxu0 0.0
        %806 = vmatprep.subr.mxu0 0.0
        %807 = vmatpush1.xpose.msra.mxu0 0.0
        %808 = vmatprep.subr.mxu0 0.0
        %809 = vmatpush1.xpose.msra.mxu0 0.0
        %810 = vmatprep.subr.mxu0 0.0
        %811 = vmatpush1.xpose.msra.mxu0 0.0
        %812 = vmatprep.subr.mxu0 0.0
        %813 = vmatpush1.xpose.msra.mxu0 0.0
        %814 = vmatprep.subr.mxu0 0.0
        %815 = vmatpush1.xpose.msra.mxu0 0.0
        %816 = vmatprep.subr.mxu0 0.0
        %817 = vmatpush1.xpose.msra.mxu0 0.0
        %818 = vmatprep.subr.mxu0 0.0
        %819 = vmatpush1.xpose.msra.mxu0 0.0
        %820 = vmatprep.subr.mxu0 0.0
        %821 = vmatpush1.xpose.msra.mxu0 0.0
        %822 = vmatprep.subr.mxu0 0.0
        %823 = vmatpush1.xpose.msra.mxu0 0.0
        %824 = vmatprep.mubr.f32.mxu0 0.0
        %825 = vmatmul.mubr.f32.gmra.mrb[0].mxu0 %v746
        %v826 = vpop.f32.mrb[0].mxu0
        %v827 = vadd.f32 %v743, %v826
        %v828 = vpop.f32.mrb[0].mxu0
        %829 = vdwg.mxu0
        %v830 = vld [vmem:[%s8] sm:$0xff]
        %v831 = vld [vmem:[%s8 + $0x8] sm:$0xff]
        %v832 = vld [vmem:[%s8 + $0x10] sm:$0xff]
        %v833 = vld [vmem:[%s8 + $0x18] sm:$0xff]
        %v834 = vld [vmem:[%s9] sm:$0x1]
        %v836 = vlaneseq
        %v837 = vshrl.u32 %v836, 7
        %v838 = vsub.s32 0, %v837
        %v839 = vrot.slane %v834, %v838
        %v842 = vsel %vm647, %v635, 0
        %v845 = vsel %vm647, %v830, 0
        %v848 = vsel %vm647, %v831, 0
        %v851 = vsel %vm647, %v832, 0
        %v854 = vsel %vm647, %v833, 0
        %856 = vmatprep.subr.mxu0 0.0
        %857 = vmatpush1.xpose.msra.mxu0 %v845
        %858 = vmatprep.subr.mxu0 0.0
        %859 = vmatpush1.xpose.msra.mxu0 %v848
        %860 = vmatprep.subr.mxu0 0.0
        %861 = vmatpush1.xpose.msra.mxu0 %v851
        %862 = vmatprep.subr.mxu0 0.0
        %863 = vmatpush1.xpose.msra.mxu0 %v854
        %864 = vmatprep.subr.mxu0 0.0
        %865 = vmatpush1.xpose.msra.mxu0 0.0
        %866 = vmatprep.subr.mxu0 0.0
        %867 = vmatpush1.xpose.msra.mxu0 0.0
        %868 = vmatprep.subr.mxu0 0.0
        %869 = vmatpush1.xpose.msra.mxu0 0.0
        %870 = vmatprep.subr.mxu0 0.0
        %871 = vmatpush1.xpose.msra.mxu0 0.0
        %872 = vmatprep.subr.mxu0 0.0
        %873 = vmatpush1.xpose.msra.mxu0 0.0
        %874 = vmatprep.subr.mxu0 0.0
        %875 = vmatpush1.xpose.msra.mxu0 0.0
        %876 = vmatprep.subr.mxu0 0.0
        %877 = vmatpush1.xpose.msra.mxu0 0.0
        %878 = vmatprep.subr.mxu0 0.0
        %879 = vmatpush1.xpose.msra.mxu0 0.0
        %880 = vmatprep.subr.mxu0 0.0
        %881 = vmatpush1.xpose.msra.mxu0 0.0
        %882 = vmatprep.subr.mxu0 0.0
        %883 = vmatpush1.xpose.msra.mxu0 0.0
        %884 = vmatprep.subr.mxu0 0.0
        %885 = vmatpush1.xpose.msra.mxu0 0.0
        %886 = vmatprep.subr.mxu0 0.0
        %887 = vmatpush1.xpose.msra.mxu0 0.0
        %888 = vmatprep.subr.mxu0 0.0
        %889 = vmatpush1.xpose.msra.mxu0 0.0
        %890 = vmatprep.subr.mxu0 0.0
        %891 = vmatpush1.xpose.msra.mxu0 0.0
        %892 = vmatprep.subr.mxu0 0.0
        %893 = vmatpush1.xpose.msra.mxu0 0.0
        %894 = vmatprep.subr.mxu0 0.0
        %895 = vmatpush1.xpose.msra.mxu0 0.0
        %896 = vmatprep.subr.mxu0 0.0
        %897 = vmatpush1.xpose.msra.mxu0 0.0
        %898 = vmatprep.subr.mxu0 0.0
        %899 = vmatpush1.xpose.msra.mxu0 0.0
        %900 = vmatprep.subr.mxu0 0.0
        %901 = vmatpush1.xpose.msra.mxu0 0.0
        %902 = vmatprep.subr.mxu0 0.0
        %903 = vmatpush1.xpose.msra.mxu0 0.0
        %904 = vmatprep.subr.mxu0 0.0
        %905 = vmatpush1.xpose.msra.mxu0 0.0
        %906 = vmatprep.subr.mxu0 0.0
        %907 = vmatpush1.xpose.msra.mxu0 0.0
        %908 = vmatprep.subr.mxu0 0.0
        %909 = vmatpush1.xpose.msra.mxu0 0.0
        %910 = vmatprep.subr.mxu0 0.0
        %911 = vmatpush1.xpose.msra.mxu0 0.0
        %912 = vmatprep.subr.mxu0 0.0
        %913 = vmatpush1.xpose.msra.mxu0 0.0
        %914 = vmatprep.subr.mxu0 0.0
        %915 = vmatpush1.xpose.msra.mxu0 0.0
        %916 = vmatprep.subr.mxu0 0.0
        %917 = vmatpush1.xpose.msra.mxu0 0.0
        %918 = vmatprep.subr.mxu0 0.0
        %919 = vmatpush1.xpose.msra.mxu0 0.0
        %920 = vmatprep.mubr.f32.mxu0 0.0
        %921 = vmatmul.mubr.f32.gmra.mrb[0].mxu0 %v842
        %v922 = vpop.f32.mrb[0].mxu0
        %v923 = vadd.f32 %v839, %v922
        %v924 = vpop.f32.mrb[0].mxu0
        %925 = vdwg.mxu0
        %v926 = vld [vmem:[%s632] sm:$0xff]
        %vm927 = vcmp.lt.f32.partialorder %v926, 0.0
        %vm928 = vcmask 64512
        %v930 = vsel %vm928, %v733, 0
        %v933 = vsel %vm928, %v827, 0
        %935 = vmatprep.subr.mxu0 0.0
        %936 = vmatpush1.xpose.msra.mxu0 %v933
        %937 = vmatprep.subr.mxu0 0.0
        %938 = vmatpush1.xpose.msra.mxu0 0.0
        %939 = vmatprep.subr.mxu0 0.0
        %940 = vmatpush1.xpose.msra.mxu0 0.0
        %941 = vmatprep.subr.mxu0 0.0
        %942 = vmatpush1.xpose.msra.mxu0 0.0
        %943 = vmatprep.subr.mxu0 0.0
        %944 = vmatpush1.xpose.msra.mxu0 0.0
        %945 = vmatprep.subr.mxu0 0.0
        %946 = vmatpush1.xpose.msra.mxu0 0.0
        %947 = vmatprep.subr.mxu0 0.0
        %948 = vmatpush1.xpose.msra.mxu0 0.0
        %949 = vmatprep.subr.mxu0 0.0
        %950 = vmatpush1.xpose.msra.mxu0 0.0
        %951 = vmatprep.subr.mxu0 0.0
        %952 = vmatpush1.xpose.msra.mxu0 0.0
        %953 = vmatprep.subr.mxu0 0.0
        %954 = vmatpush1.xpose.msra.mxu0 0.0
        %955 = vmatprep.subr.mxu0 0.0
        %956 = vmatpush1.xpose.msra.mxu0 0.0
        %957 = vmatprep.subr.mxu0 0.0
        %958 = vmatpush1.xpose.msra.mxu0 0.0
        %959 = vmatprep.subr.mxu0 0.0
        %960 = vmatpush1.xpose.msra.mxu0 0.0
        %961 = vmatprep.subr.mxu0 0.0
        %962 = vmatpush1.xpose.msra.mxu0 0.0
        %963 = vmatprep.subr.mxu0 0.0
        %964 = vmatpush1.xpose.msra.mxu0 0.0
        %965 = vmatprep.subr.mxu0 0.0
        %966 = vmatpush1.xpose.msra.mxu0 0.0
        %967 = vmatprep.subr.mxu0 0.0
        %968 = vmatpush1.xpose.msra.mxu0 0.0
        %969 = vmatprep.subr.mxu0 0.0
        %970 = vmatpush1.xpose.msra.mxu0 0.0
        %971 = vmatprep.subr.mxu0 0.0
        %972 = vmatpush1.xpose.msra.mxu0 0.0
        %973 = vmatprep.subr.mxu0 0.0
        %974 = vmatpush1.xpose.msra.mxu0 0.0
        %975 = vmatprep.subr.mxu0 0.0
        %976 = vmatpush1.xpose.msra.mxu0 0.0
        %977 = vmatprep.subr.mxu0 0.0
        %978 = vmatpush1.xpose.msra.mxu0 0.0
        %979 = vmatprep.subr.mxu0 0.0
        %980 = vmatpush1.xpose.msra.mxu0 0.0
        %981 = vmatprep.subr.mxu0 0.0
        %982 = vmatpush1.xpose.msra.mxu0 0.0
        %983 = vmatprep.subr.mxu0 0.0
        %984 = vmatpush1.xpose.msra.mxu0 0.0
        %985 = vmatprep.subr.mxu0 0.0
        %986 = vmatpush1.xpose.msra.mxu0 0.0
        %987 = vmatprep.subr.mxu0 0.0
        %988 = vmatpush1.xpose.msra.mxu0 0.0
        %989 = vmatprep.subr.mxu0 0.0
        %990 = vmatpush1.xpose.msra.mxu0 0.0
        %991 = vmatprep.subr.mxu0 0.0
        %992 = vmatpush1.xpose.msra.mxu0 0.0
        %993 = vmatprep.subr.mxu0 0.0
        %994 = vmatpush1.xpose.msra.mxu0 0.0
        %995 = vmatprep.subr.mxu0 0.0
        %996 = vmatpush1.xpose.msra.mxu0 0.0
        %997 = vmatprep.subr.mxu0 0.0
        %998 = vmatpush1.xpose.msra.mxu0 0.0
        %999 = vmatprep.mubr.f32.mxu0 0.0
        %1000 = vmatmul.mubr.f32.gmra.mrb[0].mxu0 %v930
        %v1001 = vpop.f32.mrb[0].mxu0
        %v1002 = vadd.f32 0.0, %v1001
        %v1003 = vpop.f32.mrb[0].mxu0
        %1004 = vdwg.mxu0
        %v1005 = vsel %vm927, %v926, %v1002
        %v1006 = vsel %vm928, %v1005, -inf
        %1007 = vmax.xlane.f32.xlu0 %v1006
        %v1008 = vpop.xlane.xlu0 %1007
        %v1009 = vsub.f32 %v1005, %v1008
        %v1010 = vmul.f32 %v1009, 1.442695
        %v1011 = vpow.pop %v1010
        %v1012 = vsel %vm928, %v1011, 0.0
        %1013 = vadd.xlane.f32.xlu0 %v1012
        %v1014 = vpop.xlane.xlu0 %1013
        %v1015 = vrcp.pop %v1014
        %v1016 = vmul.f32 %v1011, %v1015
        %1017 = vst.msk [vmem:[%s616] sm:$0xff] %vm928, %v1016
        %v1019 = vsel %vm928, %v1016, 0
        %1021 = vmatprep.subr.mxu0 0.0
        %1022 = vmatpush1.msra.mxu0 %v923
        %1023 = vmatprep.subr.mxu0 0.0
        %1024 = vmatpush1.msra.mxu0 0.0
        %1025 = vmatprep.subr.mxu0 0.0
        %1026 = vmatpush1.msra.mxu0 0.0
        %1027 = vmatprep.subr.mxu0 0.0
        %1028 = vmatpush1.msra.mxu0 0.0
        %1029 = vmatprep.subr.mxu0 0.0
        %1030 = vmatpush1.msra.mxu0 0.0
        %1031 = vmatprep.subr.mxu0 0.0
        %1032 = vmatpush1.msra.mxu0 0.0
        %1033 = vmatprep.subr.mxu0 0.0
        %1034 = vmatpush1.msra.mxu0 0.0
        %1035 = vmatprep.subr.mxu0 0.0
        %1036 = vmatpush1.msra.mxu0 0.0
        %1037 = vmatprep.subr.mxu0 0.0
        %1038 = vmatpush1.msra.mxu0 0.0
        %1039 = vmatprep.subr.mxu0 0.0
        %1040 = vmatpush1.msra.mxu0 0.0
        %1041 = vmatprep.subr.mxu0 0.0
        %1042 = vmatpush1.msra.mxu0 0.0
        %1043 = vmatprep.subr.mxu0 0.0
        %1044 = vmatpush1.msra.mxu0 0.0
        %1045 = vmatprep.subr.mxu0 0.0
        %1046 = vmatpush1.msra.mxu0 0.0
        %1047 = vmatprep.subr.mxu0 0.0
        %1048 = vmatpush1.msra.mxu0 0.0
        %1049 = vmatprep.subr.mxu0 0.0
        %1050 = vmatpush1.msra.mxu0 0.0
        %1051 = vmatprep.subr.mxu0 0.0
        %1052 = vmatpush1.msra.mxu0 0.0
        %1053 = vmatprep.subr.mxu0 0.0
        %1054 = vmatpush1.msra.mxu0 0.0
        %1055 = vmatprep.subr.mxu0 0.0
        %1056 = vmatpush1.msra.mxu0 0.0
        %1057 = vmatprep.subr.mxu0 0.0
        %1058 = vmatpush1.msra.mxu0 0.0
        %1059 = vmatprep.subr.mxu0 0.0
        %1060 = vmatpush1.msra.mxu0 0.0
        %1061 = vmatprep.subr.mxu0 0.0
        %1062 = vmatpush1.msra.mxu0 0.0
        %1063 = vmatprep.subr.mxu0 0.0
        %1064 = vmatpush1.msra.mxu0 0.0
        %1065 = vmatprep.subr.mxu0 0.0
        %1066 = vmatpush1.msra.mxu0 0.0
        %1067 = vmatprep.subr.mxu0 0.0
        %1068 = vmatpush1.msra.mxu0 0.0
        %1069 = vmatprep.subr.mxu0 0.0
        %1070 = vmatpush1.msra.mxu0 0.0
        %1071 = vmatprep.subr.mxu0 0.0
        %1072 = vmatpush1.msra.mxu0 0.0
        %1073 = vmatprep.subr.mxu0 0.0
        %1074 = vmatpush1.msra.mxu0 0.0
        %1075 = vmatprep.subr.mxu0 0.0
        %1076 = vmatpush1.msra.mxu0 0.0
        %1077 = vmatprep.subr.mxu0 0.0
        %1078 = vmatpush1.msra.mxu0 0.0
        %1079 = vmatprep.subr.mxu0 0.0
        %1080 = vmatpush1.msra.mxu0 0.0
        %1081 = vmatprep.subr.mxu0 0.0
        %1082 = vmatpush1.msra.mxu0 0.0
        %1083 = vmatprep.subr.mxu0 0.0
        %1084 = vmatpush1.msra.mxu0 0.0
        %1085 = vmatprep.mubr.f32.mxu0 0.0
        %1086 = vmatmul.mubr.f32.gmra.mrb[0].mxu0 %v1019
        %v1087 = vpop.f32.mrb[0].mxu0
        %v1088 = vadd.f32 0.0, %v1087
        %v1089 = vpop.f32.mrb[0].mxu0
        %1090 = vdwg.mxu0
        %1091 = vrot.lane.b32.xlu0 %v733, 120
        %v1092 = vpop.permute.xlu0 %1091
        %1093 = vrot.lane.b32.xlu0 %v827, 120
        %v1094 = vpop.permute.xlu0 %1093
        %v1095 = vsel %vm928, %v1092, 0
        %v1097 = vsel %vm928, %v1094, 0
        %1099 = vmatprep.subr.mxu0 0.0
        %1100 = vmatpush1.xpose.msra.mxu0 %v1097
        %1101 = vmatprep.subr.mxu0 0.0
        %1102 = vmatpush1.xpose.msra.mxu0 0.0
        %1103 = vmatprep.subr.mxu0 0.0
        %1104 = vmatpush1.xpose.msra.mxu0 0.0
        %1105 = vmatprep.subr.mxu0 0.0
        %1106 = vmatpush1.xpose.msra.mxu0 0.0
        %1107 = vmatprep.subr.mxu0 0.0
        %1108 = vmatpush1.xpose.msra.mxu0 0.0
        %1109 = vmatprep.subr.mxu0 0.0
        %1110 = vmatpush1.xpose.msra.mxu0 0.0
        %1111 = vmatprep.subr.mxu0 0.0
        %1112 = vmatpush1.xpose.msra.mxu0 0.0
        %1113 = vmatprep.subr.mxu0 0.0
        %1114 = vmatpush1.xpose.msra.mxu0 0.0
        %1115 = vmatprep.subr.mxu0 0.0
        %1116 = vmatpush1.xpose.msra.mxu0 0.0
        %1117 = vmatprep.subr.mxu0 0.0
        %1118 = vmatpush1.xpose.msra.mxu0 0.0
        %1119 = vmatprep.subr.mxu0 0.0
        %1120 = vmatpush1.xpose.msra.mxu0 0.0
        %1121 = vmatprep.subr.mxu0 0.0
        %1122 = vmatpush1.xpose.msra.mxu0 0.0
        %1123 = vmatprep.subr.mxu0 0.0
        %1124 = vmatpush1.xpose.msra.mxu0 0.0
        %1125 = vmatprep.subr.mxu0 0.0
        %1126 = vmatpush1.xpose.msra.mxu0 0.0
        %1127 = vmatprep.subr.mxu0 0.0
        %1128 = vmatpush1.xpose.msra.mxu0 0.0
        %1129 = vmatprep.subr.mxu0 0.0
        %1130 = vmatpush1.xpose.msra.mxu0 0.0
        %1131 = vmatprep.subr.mxu0 0.0
        %1132 = vmatpush1.xpose.msra.mxu0 0.0
        %1133 = vmatprep.subr.mxu0 0.0
        %1134 = vmatpush1.xpose.msra.mxu0 0.0
        %1135 = vmatprep.subr.mxu0 0.0
        %1136 = vmatpush1.xpose.msra.mxu0 0.0
        %1137 = vmatprep.subr.mxu0 0.0
        %1138 = vmatpush1.xpose.msra.mxu0 0.0
        %1139 = vmatprep.subr.mxu0 0.0
        %1140 = vmatpush1.xpose.msra.mxu0 0.0
        %1141 = vmatprep.subr.mxu0 0.0
        %1142 = vmatpush1.xpose.msra.mxu0 0.0
        %1143 = vmatprep.subr.mxu0 0.0
        %1144 = vmatpush1.xpose.msra.mxu0 0.0
        %1145 = vmatprep.subr.mxu0 0.0
        %1146 = vmatpush1.xpose.msra.mxu0 0.0
        %1147 = vmatprep.subr.mxu0 0.0
        %1148 = vmatpush1.xpose.msra.mxu0 0.0
        %1149 = vmatprep.subr.mxu0 0.0
        %1150 = vmatpush1.xpose.msra.mxu0 0.0
        %1151 = vmatprep.subr.mxu0 0.0
        %1152 = vmatpush1.xpose.msra.mxu0 0.0
        %1153 = vmatprep.subr.mxu0 0.0
        %1154 = vmatpush1.xpose.msra.mxu0 0.0
        %1155 = vmatprep.subr.mxu0 0.0
        %1156 = vmatpush1.xpose.msra.mxu0 0.0
        %1157 = vmatprep.subr.mxu0 0.0
        %1158 = vmatpush1.xpose.msra.mxu0 0.0
        %1159 = vmatprep.subr.mxu0 0.0
        %1160 = vmatpush1.xpose.msra.mxu0 0.0
        %1161 = vmatprep.subr.mxu0 0.0
        %1162 = vmatpush1.xpose.msra.mxu0 0.0
        %1163 = vmatprep.mubr.f32.mxu0 0.0
        %1164 = vmatmul.mubr.f32.gmra.mrb[0].mxu0 %v1095
        %v1165 = vpop.f32.mrb[0].mxu0
        %v1166 = vadd.f32 0.0, %v1165
        %v1167 = vpop.f32.mrb[0].mxu0
        %1168 = vdwg.mxu0
        %v1169 = vsel %vm927, %v926, %v1166
        %v1170 = vsel %vm928, %v1169, -inf
        %1171 = vmax.xlane.f32.xlu0 %v1170
        %v1172 = vpop.xlane.xlu0 %1171
        %v1173 = vsub.f32 %v1169, %v1172
        %v1174 = vmul.f32 %v1173, 1.442695
        %v1175 = vpow.pop %v1174
        %v1176 = vsel %vm928, %v1175, 0.0
        %1177 = vadd.xlane.f32.xlu0 %v1176
        %v1178 = vpop.xlane.xlu0 %1177
        %v1179 = vrcp.pop %v1178
        %v1180 = vmul.f32 %v1175, %v1179
        %s1181 = scalar_lea.vmem %s616, 8 [#allocation4]
        %1182 = vst.msk [vmem:[%s1181] sm:$0xff] %vm928, %v1180
        %1184 = vrot.lane.b32.xlu0 %v923, 120
        %v1185 = vpop.permute.xlu0 %1184
        %v1188 = vsel %vm928, %v1180, 0
        %1190 = vmatprep.subr.mxu0 0.0
        %1191 = vmatpush1.msra.mxu0 %v1185
        %1192 = vmatprep.subr.mxu0 0.0
        %1193 = vmatpush1.msra.mxu0 0.0
        %1194 = vmatprep.subr.mxu0 0.0
        %1195 = vmatpush1.msra.mxu0 0.0
        %1196 = vmatprep.subr.mxu0 0.0
        %1197 = vmatpush1.msra.mxu0 0.0
        %1198 = vmatprep.subr.mxu0 0.0
        %1199 = vmatpush1.msra.mxu0 0.0
        %1200 = vmatprep.subr.mxu0 0.0
        %1201 = vmatpush1.msra.mxu0 0.0
        %1202 = vmatprep.subr.mxu0 0.0
        %1203 = vmatpush1.msra.mxu0 0.0
        %1204 = vmatprep.subr.mxu0 0.0
        %1205 = vmatpush1.msra.mxu0 0.0
        %1206 = vmatprep.subr.mxu0 0.0
        %1207 = vmatpush1.msra.mxu0 0.0
        %1208 = vmatprep.subr.mxu0 0.0
        %1209 = vmatpush1.msra.mxu0 0.0
        %1210 = vmatprep.subr.mxu0 0.0
        %1211 = vmatpush1.msra.mxu0 0.0
        %1212 = vmatprep.subr.mxu0 0.0
        %1213 = vmatpush1.msra.mxu0 0.0
        %1214 = vmatprep.subr.mxu0 0.0
        %1215 = vmatpush1.msra.mxu0 0.0
        %1216 = vmatprep.subr.mxu0 0.0
        %1217 = vmatpush1.msra.mxu0 0.0
        %1218 = vmatprep.subr.mxu0 0.0
        %1219 = vmatpush1.msra.mxu0 0.0
        %1220 = vmatprep.subr.mxu0 0.0
        %1221 = vmatpush1.msra.mxu0 0.0
        %1222 = vmatprep.subr.mxu0 0.0
        %1223 = vmatpush1.msra.mxu0 0.0
        %1224 = vmatprep.subr.mxu0 0.0
        %1225 = vmatpush1.msra.mxu0 0.0
        %1226 = vmatprep.subr.mxu0 0.0
        %1227 = vmatpush1.msra.mxu0 0.0
        %1228 = vmatprep.subr.mxu0 0.0
        %1229 = vmatpush1.msra.mxu0 0.0
        %1230 = vmatprep.subr.mxu0 0.0
        %1231 = vmatpush1.msra.mxu0 0.0
        %1232 = vmatprep.subr.mxu0 0.0
        %1233 = vmatpush1.msra.mxu0 0.0
        %1234 = vmatprep.subr.mxu0 0.0
        %1235 = vmatpush1.msra.mxu0 0.0
        %1236 = vmatprep.subr.mxu0 0.0
        %1237 = vmatpush1.msra.mxu0 0.0
        %1238 = vmatprep.subr.mxu0 0.0
        %1239 = vmatpush1.msra.mxu0 0.0
        %1240 = vmatprep.subr.mxu0 0.0
        %1241 = vmatpush1.msra.mxu0 0.0
        %1242 = vmatprep.subr.mxu0 0.0
        %1243 = vmatpush1.msra.mxu0 0.0
        %1244 = vmatprep.subr.mxu0 0.0
        %1245 = vmatpush1.msra.mxu0 0.0
        %1246 = vmatprep.subr.mxu0 0.0
        %1247 = vmatpush1.msra.mxu0 0.0
        %1248 = vmatprep.subr.mxu0 0.0
        %1249 = vmatpush1.msra.mxu0 0.0
        %1250 = vmatprep.subr.mxu0 0.0
        %1251 = vmatpush1.msra.mxu0 0.0
        %1252 = vmatprep.subr.mxu0 0.0
        %1253 = vmatpush1.msra.mxu0 0.0
        %1254 = vmatprep.mubr.f32.mxu0 0.0
        %1255 = vmatmul.mubr.f32.gmra.mrb[0].mxu0 %v1188
        %v1256 = vpop.f32.mrb[0].mxu0
        %v1257 = vadd.f32 0.0, %v1256
        %v1258 = vpop.f32.mrb[0].mxu0
        %1259 = vdwg.mxu0
        %1260 = vrot.lane.b32.xlu0 %v733, 112
        %v1261 = vpop.permute.xlu0 %1260
        %1262 = vrot.lane.b32.xlu0 %v827, 112
        %v1263 = vpop.permute.xlu0 %1262
        %v1264 = vsel %vm928, %v1261, 0
        %v1266 = vsel %vm928, %v1263, 0
        %1268 = vmatprep.subr.mxu0 0.0
        %1269 = vmatpush1.xpose.msra.mxu0 %v1266
        %1270 = vmatprep.subr.mxu0 0.0
        %1271 = vmatpush1.xpose.msra.mxu0 0.0
        %1272 = vmatprep.subr.mxu0 0.0
        %1273 = vmatpush1.xpose.msra.mxu0 0.0
        %1274 = vmatprep.subr.mxu0 0.0
        %1275 = vmatpush1.xpose.msra.mxu0 0.0
        %1276 = vmatprep.subr.mxu0 0.0
        %1277 = vmatpush1.xpose.msra.mxu0 0.0
        %1278 = vmatprep.subr.mxu0 0.0
        %1279 = vmatpush1.xpose.msra.mxu0 0.0
        %1280 = vmatprep.subr.mxu0 0.0
        %1281 = vmatpush1.xpose.msra.mxu0 0.0
        %1282 = vmatprep.subr.mxu0 0.0
        %1283 = vmatpush1.xpose.msra.mxu0 0.0
        %1284 = vmatprep.subr.mxu0 0.0
        %1285 = vmatpush1.xpose.msra.mxu0 0.0
        %1286 = vmatprep.subr.mxu0 0.0
        %1287 = vmatpush1.xpose.msra.mxu0 0.0
        %1288 = vmatprep.subr.mxu0 0.0
        %1289 = vmatpush1.xpose.msra.mxu0 0.0
        %1290 = vmatprep.subr.mxu0 0.0
        %1291 = vmatpush1.xpose.msra.mxu0 0.0
        %1292 = vmatprep.subr.mxu0 0.0
        %1293 = vmatpush1.xpose.msra.mxu0 0.0
        %1294 = vmatprep.subr.mxu0 0.0
        %1295 = vmatpush1.xpose.msra.mxu0 0.0
        %1296 = vmatprep.subr.mxu0 0.0
        %1297 = vmatpush1.xpose.msra.mxu0 0.0
        %1298 = vmatprep.subr.mxu0 0.0
        %1299 = vmatpush1.xpose.msra.mxu0 0.0
        %1300 = vmatprep.subr.mxu0 0.0
        %1301 = vmatpush1.xpose.msra.mxu0 0.0
        %1302 = vmatprep.subr.mxu0 0.0
        %1303 = vmatpush1.xpose.msra.mxu0 0.0
        %1304 = vmatprep.subr.mxu0 0.0
        %1305 = vmatpush1.xpose.msra.mxu0 0.0
        %1306 = vmatprep.subr.mxu0 0.0
        %1307 = vmatpush1.xpose.msra.mxu0 0.0
        %1308 = vmatprep.subr.mxu0 0.0
        %1309 = vmatpush1.xpose.msra.mxu0 0.0
        %1310 = vmatprep.subr.mxu0 0.0
        %1311 = vmatpush1.xpose.msra.mxu0 0.0
        %1312 = vmatprep.subr.mxu0 0.0
        %1313 = vmatpush1.xpose.msra.mxu0 0.0
        %1314 = vmatprep.subr.mxu0 0.0
        %1315 = vmatpush1.xpose.msra.mxu0 0.0
        %1316 = vmatprep.subr.mxu0 0.0
        %1317 = vmatpush1.xpose.msra.mxu0 0.0
        %1318 = vmatprep.subr.mxu0 0.0
        %1319 = vmatpush1.xpose.msra.mxu0 0.0
        %1320 = vmatprep.subr.mxu0 0.0
        %1321 = vmatpush1.xpose.msra.mxu0 0.0
        %1322 = vmatprep.subr.mxu0 0.0
        %1323 = vmatpush1.xpose.msra.mxu0 0.0
        %1324 = vmatprep.subr.mxu0 0.0
        %1325 = vmatpush1.xpose.msra.mxu0 0.0
        %1326 = vmatprep.subr.mxu0 0.0
        %1327 = vmatpush1.xpose.msra.mxu0 0.0
        %1328 = vmatprep.subr.mxu0 0.0
        %1329 = vmatpush1.xpose.msra.mxu0 0.0
        %1330 = vmatprep.subr.mxu0 0.0
        %1331 = vmatpush1.xpose.msra.mxu0 0.0
        %1332 = vmatprep.mubr.f32.mxu0 0.0
        %1333 = vmatmul.mubr.f32.gmra.mrb[0].mxu0 %v1264
        %v1334 = vpop.f32.mrb[0].mxu0
        %v1335 = vadd.f32 0.0, %v1334
        %v1336 = vpop.f32.mrb[0].mxu0
        %1337 = vdwg.mxu0
        %v1338 = vsel %vm927, %v926, %v1335
        %v1339 = vsel %vm928, %v1338, -inf
        %1340 = vmax.xlane.f32.xlu0 %v1339
        %v1341 = vpop.xlane.xlu0 %1340
        %v1342 = vsub.f32 %v1338, %v1341
        %v1343 = vmul.f32 %v1342, 1.442695
        %v1344 = vpow.pop %v1343
        %v1345 = vsel %vm928, %v1344, 0.0
        %1346 = vadd.xlane.f32.xlu0 %v1345
        %v1347 = vpop.xlane.xlu0 %1346
        %v1348 = vrcp.pop %v1347
        %v1349 = vmul.f32 %v1344, %v1348
        %s1350 = scalar_lea.vmem %s616, 16 [#allocation4]
        %1351 = vst.msk [vmem:[%s1350] sm:$0xff] %vm928, %v1349
        %1352 = vrot.lane.b32.xlu0 %v923, 112
        %v1353 = vpop.permute.xlu0 %1352
        %v1356 = vsel %vm928, %v1349, 0
        %1358 = vmatprep.subr.mxu0 0.0
        %1359 = vmatpush1.msra.mxu0 %v1353
        %1360 = vmatprep.subr.mxu0 0.0
        %1361 = vmatpush1.msra.mxu0 0.0
        %1362 = vmatprep.subr.mxu0 0.0
        %1363 = vmatpush1.msra.mxu0 0.0
        %1364 = vmatprep.subr.mxu0 0.0
        %1365 = vmatpush1.msra.mxu0 0.0
        %1366 = vmatprep.subr.mxu0 0.0
        %1367 = vmatpush1.msra.mxu0 0.0
        %1368 = vmatprep.subr.mxu0 0.0
        %1369 = vmatpush1.msra.mxu0 0.0
        %1370 = vmatprep.subr.mxu0 0.0
        %1371 = vmatpush1.msra.mxu0 0.0
        %1372 = vmatprep.subr.mxu0 0.0
        %1373 = vmatpush1.msra.mxu0 0.0
        %1374 = vmatprep.subr.mxu0 0.0
        %1375 = vmatpush1.msra.mxu0 0.0
        %1376 = vmatprep.subr.mxu0 0.0
        %1377 = vmatpush1.msra.mxu0 0.0
        %1378 = vmatprep.subr.mxu0 0.0
        %1379 = vmatpush1.msra.mxu0 0.0
        %1380 = vmatprep.subr.mxu0 0.0
        %1381 = vmatpush1.msra.mxu0 0.0
        %1382 = vmatprep.subr.mxu0 0.0
        %1383 = vmatpush1.msra.mxu0 0.0
        %1384 = vmatprep.subr.mxu0 0.0
        %1385 = vmatpush1.msra.mxu0 0.0
        %1386 = vmatprep.subr.mxu0 0.0
        %1387 = vmatpush1.msra.mxu0 0.0
        %1388 = vmatprep.subr.mxu0 0.0
        %1389 = vmatpush1.msra.mxu0 0.0
        %1390 = vmatprep.subr.mxu0 0.0
        %1391 = vmatpush1.msra.mxu0 0.0
        %1392 = vmatprep.subr.mxu0 0.0
        %1393 = vmatpush1.msra.mxu0 0.0
        %1394 = vmatprep.subr.mxu0 0.0
        %1395 = vmatpush1.msra.mxu0 0.0
        %1396 = vmatprep.subr.mxu0 0.0
        %1397 = vmatpush1.msra.mxu0 0.0
        %1398 = vmatprep.subr.mxu0 0.0
        %1399 = vmatpush1.msra.mxu0 0.0
        %1400 = vmatprep.subr.mxu0 0.0
        %1401 = vmatpush1.msra.mxu0 0.0
        %1402 = vmatprep.subr.mxu0 0.0
        %1403 = vmatpush1.msra.mxu0 0.0
        %1404 = vmatprep.subr.mxu0 0.0
        %1405 = vmatpush1.msra.mxu0 0.0
        %1406 = vmatprep.subr.mxu0 0.0
        %1407 = vmatpush1.msra.mxu0 0.0
        %1408 = vmatprep.subr.mxu0 0.0
        %1409 = vmatpush1.msra.mxu0 0.0
        %1410 = vmatprep.subr.mxu0 0.0
        %1411 = vmatpush1.msra.mxu0 0.0
        %1412 = vmatprep.subr.mxu0 0.0
        %1413 = vmatpush1.msra.mxu0 0.0
        %1414 = vmatprep.subr.mxu0 0.0
        %1415 = vmatpush1.msra.mxu0 0.0
        %1416 = vmatprep.subr.mxu0 0.0
        %1417 = vmatpush1.msra.mxu0 0.0
        %1418 = vmatprep.subr.mxu0 0.0
        %1419 = vmatpush1.msra.mxu0 0.0
        %1420 = vmatprep.subr.mxu0 0.0
        %1421 = vmatpush1.msra.mxu0 0.0
        %1422 = vmatprep.mubr.f32.mxu0 0.0
        %1423 = vmatmul.mubr.f32.gmra.mrb[0].mxu0 %v1356
        %v1424 = vpop.f32.mrb[0].mxu0
        %v1425 = vadd.f32 0.0, %v1424
        %v1426 = vpop.f32.mrb[0].mxu0
        %1427 = vdwg.mxu0
        %1428 = vrot.lane.b32.xlu0 %v733, 104
        %v1429 = vpop.permute.xlu0 %1428
        %1430 = vrot.lane.b32.xlu0 %v827, 104
        %v1431 = vpop.permute.xlu0 %1430
        %v1432 = vsel %vm928, %v1429, 0
        %v1434 = vsel %vm928, %v1431, 0
        %1436 = vmatprep.subr.mxu0 0.0
        %1437 = vmatpush1.xpose.msra.mxu0 %v1434
        %1438 = vmatprep.subr.mxu0 0.0
        %1439 = vmatpush1.xpose.msra.mxu0 0.0
        %1440 = vmatprep.subr.mxu0 0.0
        %1441 = vmatpush1.xpose.msra.mxu0 0.0
        %1442 = vmatprep.subr.mxu0 0.0
        %1443 = vmatpush1.xpose.msra.mxu0 0.0
        %1444 = vmatprep.subr.mxu0 0.0
        %1445 = vmatpush1.xpose.msra.mxu0 0.0
        %1446 = vmatprep.subr.mxu0 0.0
        %1447 = vmatpush1.xpose.msra.mxu0 0.0
        %1448 = vmatprep.subr.mxu0 0.0
        %1449 = vmatpush1.xpose.msra.mxu0 0.0
        %1450 = vmatprep.subr.mxu0 0.0
        %1451 = vmatpush1.xpose.msra.mxu0 0.0
        %1452 = vmatprep.subr.mxu0 0.0
        %1453 = vmatpush1.xpose.msra.mxu0 0.0
        %1454 = vmatprep.subr.mxu0 0.0
        %1455 = vmatpush1.xpose.msra.mxu0 0.0
        %1456 = vmatprep.subr.mxu0 0.0
        %1457 = vmatpush1.xpose.msra.mxu0 0.0
        %1458 = vmatprep.subr.mxu0 0.0
        %1459 = vmatpush1.xpose.msra.mxu0 0.0
        %1460 = vmatprep.subr.mxu0 0.0
        %1461 = vmatpush1.xpose.msra.mxu0 0.0
        %1462 = vmatprep.subr.mxu0 0.0
        %1463 = vmatpush1.xpose.msra.mxu0 0.0
        %1464 = vmatprep.subr.mxu0 0.0
        %1465 = vmatpush1.xpose.msra.mxu0 0.0
        %1466 = vmatprep.subr.mxu0 0.0
        %1467 = vmatpush1.xpose.msra.mxu0 0.0
        %1468 = vmatprep.subr.mxu0 0.0
        %1469 = vmatpush1.xpose.msra.mxu0 0.0
        %1470 = vmatprep.subr.mxu0 0.0
        %1471 = vmatpush1.xpose.msra.mxu0 0.0
        %1472 = vmatprep.subr.mxu0 0.0
        %1473 = vmatpush1.xpose.msra.mxu0 0.0
        %1474 = vmatprep.subr.mxu0 0.0
        %1475 = vmatpush1.xpose.msra.mxu0 0.0
        %1476 = vmatprep.subr.mxu0 0.0
        %1477 = vmatpush1.xpose.msra.mxu0 0.0
        %1478 = vmatprep.subr.mxu0 0.0
        %1479 = vmatpush1.xpose.msra.mxu0 0.0
        %1480 = vmatprep.subr.mxu0 0.0
        %1481 = vmatpush1.xpose.msra.mxu0 0.0
        %1482 = vmatprep.subr.mxu0 0.0
        %1483 = vmatpush1.xpose.msra.mxu0 0.0
        %1484 = vmatprep.subr.mxu0 0.0
        %1485 = vmatpush1.xpose.msra.mxu0 0.0
        %1486 = vmatprep.subr.mxu0 0.0
        %1487 = vmatpush1.xpose.msra.mxu0 0.0
        %1488 = vmatprep.subr.mxu0 0.0
        %1489 = vmatpush1.xpose.msra.mxu0 0.0
        %1490 = vmatprep.subr.mxu0 0.0
        %1491 = vmatpush1.xpose.msra.mxu0 0.0
        %1492 = vmatprep.subr.mxu0 0.0
        %1493 = vmatpush1.xpose.msra.mxu0 0.0
        %1494 = vmatprep.subr.mxu0 0.0
        %1495 = vmatpush1.xpose.msra.mxu0 0.0
        %1496 = vmatprep.subr.mxu0 0.0
        %1497 = vmatpush1.xpose.msra.mxu0 0.0
        %1498 = vmatprep.subr.mxu0 0.0
        %1499 = vmatpush1.xpose.msra.mxu0 0.0
        %1500 = vmatprep.mubr.f32.mxu0 0.0
        %1501 = vmatmul.mubr.f32.gmra.mrb[0].mxu0 %v1432
        %v1502 = vpop.f32.mrb[0].mxu0
        %v1503 = vadd.f32 0.0, %v1502
        %v1504 = vpop.f32.mrb[0].mxu0
        %1505 = vdwg.mxu0
        %v1506 = vsel %vm927, %v926, %v1503
        %v1507 = vsel %vm928, %v1506, -inf
        %1508 = vmax.xlane.f32.xlu0 %v1507
        %v1509 = vpop.xlane.xlu0 %1508
        %v1510 = vsub.f32 %v1506, %v1509
        %v1511 = vmul.f32 %v1510, 1.442695
        %v1512 = vpow.pop %v1511
        %v1513 = vsel %vm928, %v1512, 0.0
        %1514 = vadd.xlane.f32.xlu0 %v1513
        %v1515 = vpop.xlane.xlu0 %1514
        %v1516 = vrcp.pop %v1515
        %v1517 = vmul.f32 %v1512, %v1516
        %s1518 = scalar_lea.vmem %s616, 24 [#allocation4]
        %1519 = vst.msk [vmem:[%s1518] sm:$0xff] %vm928, %v1517
        %1520 = vrot.lane.b32.xlu0 %v923, 104
        %v1521 = vpop.permute.xlu0 %1520
        %v1524 = vsel %vm928, %v1517, 0
        %1526 = vmatprep.subr.mxu0 0.0
        %1527 = vmatpush1.msra.mxu0 %v1521
        %1528 = vmatprep.subr.mxu0 0.0
        %1529 = vmatpush1.msra.mxu0 0.0
        %1530 = vmatprep.subr.mxu0 0.0
        %1531 = vmatpush1.msra.mxu0 0.0
        %1532 = vmatprep.subr.mxu0 0.0
        %1533 = vmatpush1.msra.mxu0 0.0
        %1534 = vmatprep.subr.mxu0 0.0
        %1535 = vmatpush1.msra.mxu0 0.0
        %1536 = vmatprep.subr.mxu0 0.0
        %1537 = vmatpush1.msra.mxu0 0.0
        %1538 = vmatprep.subr.mxu0 0.0
        %1539 = vmatpush1.msra.mxu0 0.0
        %1540 = vmatprep.subr.mxu0 0.0
        %1541 = vmatpush1.msra.mxu0 0.0
        %1542 = vmatprep.subr.mxu0 0.0
        %1543 = vmatpush1.msra.mxu0 0.0
        %1544 = vmatprep.subr.mxu0 0.0
        %1545 = vmatpush1.msra.mxu0 0.0
        %1546 = vmatprep.subr.mxu0 0.0
        %1547 = vmatpush1.msra.mxu0 0.0
        %1548 = vmatprep.subr.mxu0 0.0
        %1549 = vmatpush1.msra.mxu0 0.0
        %1550 = vmatprep.subr.mxu0 0.0
        %1551 = vmatpush1.msra.mxu0 0.0
        %1552 = vmatprep.subr.mxu0 0.0
        %1553 = vmatpush1.msra.mxu0 0.0
        %1554 = vmatprep.subr.mxu0 0.0
        %1555 = vmatpush1.msra.mxu0 0.0
        %1556 = vmatprep.subr.mxu0 0.0
        %1557 = vmatpush1.msra.mxu0 0.0
        %1558 = vmatprep.subr.mxu0 0.0
        %1559 = vmatpush1.msra.mxu0 0.0
        %1560 = vmatprep.subr.mxu0 0.0
        %1561 = vmatpush1.msra.mxu0 0.0
        %1562 = vmatprep.subr.mxu0 0.0
        %1563 = vmatpush1.msra.mxu0 0.0
        %1564 = vmatprep.subr.mxu0 0.0
        %1565 = vmatpush1.msra.mxu0 0.0
        %1566 = vmatprep.subr.mxu0 0.0
        %1567 = vmatpush1.msra.mxu0 0.0
        %1568 = vmatprep.subr.mxu0 0.0
        %1569 = vmatpush1.msra.mxu0 0.0
        %1570 = vmatprep.subr.mxu0 0.0
        %1571 = vmatpush1.msra.mxu0 0.0
        %1572 = vmatprep.subr.mxu0 0.0
        %1573 = vmatpush1.msra.mxu0 0.0
        %1574 = vmatprep.subr.mxu0 0.0
        %1575 = vmatpush1.msra.mxu0 0.0
        %1576 = vmatprep.subr.mxu0 0.0
        %1577 = vmatpush1.msra.mxu0 0.0
        %1578 = vmatprep.subr.mxu0 0.0
        %1579 = vmatpush1.msra.mxu0 0.0
        %1580 = vmatprep.subr.mxu0 0.0
        %1581 = vmatpush1.msra.mxu0 0.0
        %1582 = vmatprep.subr.mxu0 0.0
        %1583 = vmatpush1.msra.mxu0 0.0
        %1584 = vmatprep.subr.mxu0 0.0
        %1585 = vmatpush1.msra.mxu0 0.0
        %1586 = vmatprep.subr.mxu0 0.0
        %1587 = vmatpush1.msra.mxu0 0.0
        %1588 = vmatprep.subr.mxu0 0.0
        %1589 = vmatpush1.msra.mxu0 0.0
        %1590 = vmatprep.mubr.f32.mxu0 0.0
        %1591 = vmatmul.mubr.f32.gmra.mrb[0].mxu0 %v1524
        %v1592 = vpop.f32.mrb[0].mxu0
        %v1593 = vadd.f32 0.0, %v1592
        %v1594 = vpop.f32.mrb[0].mxu0
        %1595 = vdwg.mxu0
        %1597 = vrot.lane.b32.xlu0 %v1257, 8
        %v1598 = vpop.permute.xlu0 %1597
        %1601 = vrot.lane.b32.xlu0 %v1425, 16
        %v1602 = vpop.permute.xlu0 %1601
        %1605 = vrot.lane.b32.xlu0 %v1593, 24
        %v1606 = vpop.permute.xlu0 %1605
        %v1608 = vsel %vm928, %v1088, %v1598
        %vm1609 = vcmask 130048
        %v1610 = vsel %vm1609, %v1608, %v1602
        %vm1611 = vcmask 195584
        %v1612 = vsel %vm1611, %v1610, %v1606
        %v1613 = vld [vmem:[%s10] sm:$0xff]
        %v1614 = vld [vmem:[%s10 + $0x8] sm:$0xff]
        %v1615 = vld [vmem:[%s10 + $0x10] sm:$0xff]
        %v1616 = vld [vmem:[%s10 + $0x18] sm:$0xff]
        %v1617 = vld [vmem:[%s11] sm:$0x1]
        %v1619 = vlaneseq
        %v1620 = vshrl.u32 %v1619, 7
        %v1621 = vsub.s32 0, %v1620
        %v1622 = vrot.slane %v1617, %v1621
        %v1625 = vsel %vm647, %v1612, 0
        %v1628 = vsel %vm647, %v1613, 0
        %v1631 = vsel %vm647, %v1614, 0
        %v1634 = vsel %vm647, %v1615, 0
        %v1637 = vsel %vm647, %v1616, 0
        %1639 = vmatprep.subr.mxu0 0.0
        %1640 = vmatpush1.xpose.msra.mxu0 %v1628
        %1641 = vmatprep.subr.mxu0 0.0
        %1642 = vmatpush1.xpose.msra.mxu0 %v1631
        %1643 = vmatprep.subr.mxu0 0.0
        %1644 = vmatpush1.xpose.msra.mxu0 %v1634
        %1645 = vmatprep.subr.mxu0 0.0
        %1646 = vmatpush1.xpose.msra.mxu0 %v1637
        %1647 = vmatprep.subr.mxu0 0.0
        %1648 = vmatpush1.xpose.msra.mxu0 0.0
        %1649 = vmatprep.subr.mxu0 0.0
        %1650 = vmatpush1.xpose.msra.mxu0 0.0
        %1651 = vmatprep.subr.mxu0 0.0
        %1652 = vmatpush1.xpose.msra.mxu0 0.0
        %1653 = vmatprep.subr.mxu0 0.0
        %1654 = vmatpush1.xpose.msra.mxu0 0.0
        %1655 = vmatprep.subr.mxu0 0.0
        %1656 = vmatpush1.xpose.msra.mxu0 0.0
        %1657 = vmatprep.subr.mxu0 0.0
        %1658 = vmatpush1.xpose.msra.mxu0 0.0
        %1659 = vmatprep.subr.mxu0 0.0
        %1660 = vmatpush1.xpose.msra.mxu0 0.0
        %1661 = vmatprep.subr.mxu0 0.0
        %1662 = vmatpush1.xpose.msra.mxu0 0.0
        %1663 = vmatprep.subr.mxu0 0.0
        %1664 = vmatpush1.xpose.msra.mxu0 0.0
        %1665 = vmatprep.subr.mxu0 0.0
        %1666 = vmatpush1.xpose.msra.mxu0 0.0
        %1667 = vmatprep.subr.mxu0 0.0
        %1668 = vmatpush1.xpose.msra.mxu0 0.0
        %1669 = vmatprep.subr.mxu0 0.0
        %1670 = vmatpush1.xpose.msra.mxu0 0.0
        %1671 = vmatprep.subr.mxu0 0.0
        %1672 = vmatpush1.xpose.msra.mxu0 0.0
        %1673 = vmatprep.subr.mxu0 0.0
        %1674 = vmatpush1.xpose.msra.mxu0 0.0
        %1675 = vmatprep.subr.mxu0 0.0
        %1676 = vmatpush1.xpose.msra.mxu0 0.0
        %1677 = vmatprep.subr.mxu0 0.0
        %1678 = vmatpush1.xpose.msra.mxu0 0.0
        %1679 = vmatprep.subr.mxu0 0.0
        %1680 = vmatpush1.xpose.msra.mxu0 0.0
        %1681 = vmatprep.subr.mxu0 0.0
        %1682 = vmatpush1.xpose.msra.mxu0 0.0
        %1683 = vmatprep.subr.mxu0 0.0
        %1684 = vmatpush1.xpose.msra.mxu0 0.0
        %1685 = vmatprep.subr.mxu0 0.0
        %1686 = vmatpush1.xpose.msra.mxu0 0.0
        %1687 = vmatprep.subr.mxu0 0.0
        %1688 = vmatpush1.xpose.msra.mxu0 0.0
        %1689 = vmatprep.subr.mxu0 0.0
        %1690 = vmatpush1.xpose.msra.mxu0 0.0
        %1691 = vmatprep.subr.mxu0 0.0
        %1692 = vmatpush1.xpose.msra.mxu0 0.0
        %1693 = vmatprep.subr.mxu0 0.0
        %1694 = vmatpush1.xpose.msra.mxu0 0.0
        %1695 = vmatprep.subr.mxu0 0.0
        %1696 = vmatpush1.xpose.msra.mxu0 0.0
        %1697 = vmatprep.subr.mxu0 0.0
        %1698 = vmatpush1.xpose.msra.mxu0 0.0
        %1699 = vmatprep.subr.mxu0 0.0
        %1700 = vmatpush1.xpose.msra.mxu0 0.0
        %1701 = vmatprep.subr.mxu0 0.0
        %1702 = vmatpush1.xpose.msra.mxu0 0.0
        %1703 = vmatprep.mubr.f32.mxu0 0.0
        %1704 = vmatmul.mubr.f32.gmra.mrb[0].mxu0 %v1625
        %v1705 = vpop.f32.mrb[0].mxu0
        %v1706 = vadd.f32 %v1622, %v1705
        %v1707 = vpop.f32.mrb[0].mxu0
        %1708 = vdwg.mxu0
        %v1709 = vld [vmem:[%s12] sm:$0xff]
        %v1710 = vld [vmem:[%s12 + $0x8] sm:$0xff]
        %v1711 = vld [vmem:[%s12 + $0x10] sm:$0xff]
        %v1712 = vld [vmem:[%s12 + $0x18] sm:$0xff]
        %v1713 = vld [vmem:[%s13] sm:$0xff]
        %v1714 = vld [vmem:[%s13 + $0x8] sm:$0xff]
        %v1715 = vld [vmem:[%s13 + $0x10] sm:$0xff]
        %v1716 = vld [vmem:[%s13 + $0x18] sm:$0xff]
        %v1718 = vsel %vm647, %v1713, 0
        %v1721 = vsel %vm647, %v1714, 0
        %v1724 = vsel %vm647, %v1715, 0
        %v1727 = vsel %vm647, %v1716, 0
        %1729 = vmatprep.subr.mxu0 0.0
        %1730 = vmatpush1.xpose.msra.mxu0 %v1718
        %1731 = vmatprep.subr.mxu0 0.0
        %1732 = vmatpush1.xpose.msra.mxu0 %v1721
        %1733 = vmatprep.subr.mxu0 0.0
        %1734 = vmatpush1.xpose.msra.mxu0 %v1724
        %1735 = vmatprep.subr.mxu0 0.0
        %1736 = vmatpush1.xpose.msra.mxu0 %v1727
        %1737 = vmatprep.subr.mxu0 0.0
        %1738 = vmatpush1.xpose.msra.mxu0 0.0
        %1739 = vmatprep.subr.mxu0 0.0
        %1740 = vmatpush1.xpose.msra.mxu0 0.0
        %1741 = vmatprep.subr.mxu0 0.0
        %1742 = vmatpush1.xpose.msra.mxu0 0.0
        %1743 = vmatprep.subr.mxu0 0.0
        %1744 = vmatpush1.xpose.msra.mxu0 0.0
        %1745 = vmatprep.subr.mxu0 0.0
        %1746 = vmatpush1.xpose.msra.mxu0 0.0
        %1747 = vmatprep.subr.mxu0 0.0
        %1748 = vmatpush1.xpose.msra.mxu0 0.0
        %1749 = vmatprep.subr.mxu0 0.0
        %1750 = vmatpush1.xpose.msra.mxu0 0.0
        %1751 = vmatprep.subr.mxu0 0.0
        %1752 = vmatpush1.xpose.msra.mxu0 0.0
        %1753 = vmatprep.subr.mxu0 0.0
        %1754 = vmatpush1.xpose.msra.mxu0 0.0
        %1755 = vmatprep.subr.mxu0 0.0
        %1756 = vmatpush1.xpose.msra.mxu0 0.0
        %1757 = vmatprep.subr.mxu0 0.0
        %1758 = vmatpush1.xpose.msra.mxu0 0.0
        %1759 = vmatprep.subr.mxu0 0.0
        %1760 = vmatpush1.xpose.msra.mxu0 0.0
        %1761 = vmatprep.subr.mxu0 0.0
        %1762 = vmatpush1.xpose.msra.mxu0 0.0
        %1763 = vmatprep.subr.mxu0 0.0
        %1764 = vmatpush1.xpose.msra.mxu0 0.0
        %1765 = vmatprep.subr.mxu0 0.0
        %1766 = vmatpush1.xpose.msra.mxu0 0.0
        %1767 = vmatprep.subr.mxu0 0.0
        %1768 = vmatpush1.xpose.msra.mxu0 0.0
        %1769 = vmatprep.subr.mxu0 0.0
        %1770 = vmatpush1.xpose.msra.mxu0 0.0
        %1771 = vmatprep.subr.mxu0 0.0
        %1772 = vmatpush1.xpose.msra.mxu0 0.0
        %1773 = vmatprep.subr.mxu0 0.0
        %1774 = vmatpush1.xpose.msra.mxu0 0.0
        %1775 = vmatprep.subr.mxu0 0.0
        %1776 = vmatpush1.xpose.msra.mxu0 0.0
        %1777 = vmatprep.subr.mxu0 0.0
        %1778 = vmatpush1.xpose.msra.mxu0 0.0
        %1779 = vmatprep.subr.mxu0 0.0
        %1780 = vmatpush1.xpose.msra.mxu0 0.0
        %1781 = vmatprep.subr.mxu0 0.0
        %1782 = vmatpush1.xpose.msra.mxu0 0.0
        %1783 = vmatprep.subr.mxu0 0.0
        %1784 = vmatpush1.xpose.msra.mxu0 0.0
        %1785 = vmatprep.subr.mxu0 0.0
        %1786 = vmatpush1.xpose.msra.mxu0 0.0
        %1787 = vmatprep.subr.mxu0 0.0
        %1788 = vmatpush1.xpose.msra.mxu0 0.0
        %1789 = vmatprep.subr.mxu0 0.0
        %1790 = vmatpush1.xpose.msra.mxu0 0.0
        %1791 = vmatprep.subr.mxu0 0.0
        %1792 = vmatpush1.xpose.msra.mxu0 0.0
        %1793 = vmatprep.mubr.f32.mxu0 0.0
        %1794 = vmatmul.mubr.f32.gmra.mrb[0].mxu0 %v649
        %v1795 = vpop.f32.mrb[0].mxu0
        %v1796 = vadd.f32 0.0, %v1795
        %v1797 = vpop.f32.mrb[0].mxu0
        %1798 = vdwg.mxu0
        %v1800 = vsel %vm647, %v1706, 0
        %v1803 = vsel %vm647, %v1709, 0
        %v1806 = vsel %vm647, %v1710, 0
        %v1809 = vsel %vm647, %v1711, 0
        %v1812 = vsel %vm647, %v1712, 0
        %1814 = vmatprep.subr.mxu0 0.0
        %1815 = vmatpush1.xpose.msra.mxu0 %v1803
        %1816 = vmatprep.subr.mxu0 0.0
        %1817 = vmatpush1.xpose.msra.mxu0 %v1806
        %1818 = vmatprep.subr.mxu0 0.0
        %1819 = vmatpush1.xpose.msra.mxu0 %v1809
        %1820 = vmatprep.subr.mxu0 0.0
        %1821 = vmatpush1.xpose.msra.mxu0 %v1812
        %1822 = vmatprep.subr.mxu0 0.0
        %1823 = vmatpush1.xpose.msra.mxu0 0.0
        %1824 = vmatprep.subr.mxu0 0.0
        %1825 = vmatpush1.xpose.msra.mxu0 0.0
        %1826 = vmatprep.subr.mxu0 0.0
        %1827 = vmatpush1.xpose.msra.mxu0 0.0
        %1828 = vmatprep.subr.mxu0 0.0
        %1829 = vmatpush1.xpose.msra.mxu0 0.0
        %1830 = vmatprep.subr.mxu0 0.0
        %1831 = vmatpush1.xpose.msra.mxu0 0.0
        %1832 = vmatprep.subr.mxu0 0.0
        %1833 = vmatpush1.xpose.msra.mxu0 0.0
        %1834 = vmatprep.subr.mxu0 0.0
        %1835 = vmatpush1.xpose.msra.mxu0 0.0
        %1836 = vmatprep.subr.mxu0 0.0
        %1837 = vmatpush1.xpose.msra.mxu0 0.0
        %1838 = vmatprep.subr.mxu0 0.0
        %1839 = vmatpush1.xpose.msra.mxu0 0.0
        %1840 = vmatprep.subr.mxu0 0.0
        %1841 = vmatpush1.xpose.msra.mxu0 0.0
        %1842 = vmatprep.subr.mxu0 0.0
        %1843 = vmatpush1.xpose.msra.mxu0 0.0
        %1844 = vmatprep.subr.mxu0 0.0
        %1845 = vmatpush1.xpose.msra.mxu0 0.0
        %1846 = vmatprep.subr.mxu0 0.0
        %1847 = vmatpush1.xpose.msra.mxu0 0.0
        %1848 = vmatprep.subr.mxu0 0.0
        %1849 = vmatpush1.xpose.msra.mxu0 0.0
        %1850 = vmatprep.subr.mxu0 0.0
        %1851 = vmatpush1.xpose.msra.mxu0 0.0
        %1852 = vmatprep.subr.mxu0 0.0
        %1853 = vmatpush1.xpose.msra.mxu0 0.0
        %1854 = vmatprep.subr.mxu0 0.0
        %1855 = vmatpush1.xpose.msra.mxu0 0.0
        %1856 = vmatprep.subr.mxu0 0.0
        %1857 = vmatpush1.xpose.msra.mxu0 0.0
        %1858 = vmatprep.subr.mxu0 0.0
        %1859 = vmatpush1.xpose.msra.mxu0 0.0
        %1860 = vmatprep.subr.mxu0 0.0
        %1861 = vmatpush1.xpose.msra.mxu0 0.0
        %1862 = vmatprep.subr.mxu0 0.0
        %1863 = vmatpush1.xpose.msra.mxu0 0.0
        %1864 = vmatprep.subr.mxu0 0.0
        %1865 = vmatpush1.xpose.msra.mxu0 0.0
        %1866 = vmatprep.subr.mxu0 0.0
        %1867 = vmatpush1.xpose.msra.mxu0 0.0
        %1868 = vmatprep.subr.mxu0 0.0
        %1869 = vmatpush1.xpose.msra.mxu0 0.0
        %1870 = vmatprep.subr.mxu0 0.0
        %1871 = vmatpush1.xpose.msra.mxu0 0.0
        %1872 = vmatprep.subr.mxu0 0.0
        %1873 = vmatpush1.xpose.msra.mxu0 0.0
        %1874 = vmatprep.subr.mxu0 0.0
        %1875 = vmatpush1.xpose.msra.mxu0 0.0
        %1876 = vmatprep.subr.mxu0 0.0
        %1877 = vmatpush1.xpose.msra.mxu0 0.0
        %1878 = vmatprep.mubr.f32.mxu0 0.0
        %1879 = vmatmul.mubr.f32.gmra.mrb[0].mxu0 %v1800
        %v1880 = vpop.f32.mrb[0].mxu0
        %v1881 = vadd.f32 %v1796, %v1880
        %v1882 = vpop.f32.mrb[0].mxu0
        %1883 = vdwg.mxu0
        %v1884 = vld [vmem:[%s14] sm:$0x1]
        %v1886 = vlaneseq
        %v1887 = vshrl.u32 %v1886, 7
        %v1888 = vsub.s32 0, %v1887
        %v1889 = vrot.slane %v1884, %v1888
        %v1891 = vadd.f32 %v1881, %v1889
        %v1892 = vsel %vm647, %v1891, 0.0
        %1893 = vadd.xlane.f32.xlu0 %v1892
        %v1894 = vpop.xlane.xlu0 %1893
        %v1895 = vmul.f32 %v1891, %v1891
        %v1896 = vsel %vm647, %v1895, 0.0
        %1897 = vadd.xlane.f32.xlu0 %v1896
        %v1898 = vpop.xlane.xlu0 %1897
        %v1899 = vmul.f32 %v1894, 0.03125
        %v1900 = vmul.f32 %v1899, %v1894
        %v1901 = vsub.f32 %v1898, %v1900
        %v1902 = vrcp.pop 31.0
        %v1903 = vmul.f32 %v1901, %v1902
        %v1904 = vmax.f32 %v1903, 0.0
        %v1905 = vsub.f32 %v1891, %v1899
        %v1906 = vrsqrt.pop %v1904
        %v1907 = vmul.f32 %v1904, %v1906
        %vm1908 = vcmp.eq.f32.partialorder %v1904, inf
        %v1909 = vsel %vm1908, %v1904, %v1907
        %vm1910 = vcmp.eq.f32.partialorder %v1904, 0.0
        %v1911 = vand.u32 %v1904, 2147483648
        %v1912 = vsel %vm1910, %v1911, %v1909
        %v1913 = vadd.f32 %v1912, 0.001
        %v1914 = vrcp.pop %v1913
        %v1915 = vmul.f32 %v1905, %v1914
        %v1916 = vld [vmem:[%s15] sm:$0x1]
        %v1918 = vlaneseq
        %v1919 = vshrl.u32 %v1918, 7
        %v1920 = vsub.s32 0, %v1919
        %v1921 = vrot.slane %v1916, %v1920
        %v1923 = vmul.f32 %v1915, %v1921
        %v1924 = vld [vmem:[%s16] sm:$0x1]
        %v1926 = vlaneseq
        %v1927 = vshrl.u32 %v1926, 7
        %v1928 = vsub.s32 0, %v1927
        %v1929 = vrot.slane %v1924, %v1928
        %v1931 = vadd.f32 %v1923, %v1929
        %1932 = vst.msk [vmem:[%s609] sm:$0xff] %vm647, %v1931
        %s1933 = sand.u32 %s421, 1
        %s1934 = scalar_lea.sflag [#allocation3], %s1933
        %s1935 = sand.u32 %s421, 1
        %s1936 = smul.addr %s1935, 8
        %s1937 = scalar_lea.vmem [#allocation2], %s1936
        %s1938 = sand.u32 %s447, 1
        %s1939 = scalar_lea.sflag [#allocation5], %s1938
        %s1940 = sand.u32 %s447, 1
        %s1941 = smul.addr %s1940, 32
        %s1942 = scalar_lea.vmem [#allocation4], %s1941
        // Predicated region
        $region89: #{graph_att_multihead_basic.1} parent=87 // pred_check
          %p1943 = pneg %p431
        $region90: #{graph_att_multihead_basic.1} parent=87 // pred_check_branch
          %1945 = sbr.rel (%p1943) target = $region92
        $region91: #{graph_att_multihead_basic.1} parent=87 // pred_region
          %s1947 = ssub.s32 128, 128
          %1948 = vsyncadd %s1934, %s1947
          %s1949 = smul.addr %s36, 128
          %s1950 = scalar_lea.hbm %s17, %s1949
          %s1952 = sshll.u32 %s1937, 4
          %s1953 = int_to_ptr.vmem [resolvable:$true] %s1952
          %1955 = dma.vmem_to_hbm [thread:$0]  %s1953, 128, %s1950, %s1934
        $region92: #{graph_att_multihead_basic.1} parent=87 // pred_fallthru
          _
        // Predicated region
        $region93: #{graph_att_multihead_basic.1} parent=87 // pred_check
          %p1956 = pneg %p457
        $region94: #{graph_att_multihead_basic.1} parent=87 // pred_check_branch
          %1958 = sbr.rel (%p1956) target = $region96
        $region95: #{graph_att_multihead_basic.1} parent=87 // pred_region
          %s1960 = ssub.s32 512, 512
          %1961 = vsyncadd %s1939, %s1960
          %s1962 = smul.addr %s36, 128
          %s1963 = scalar_lea.hbm %s18, %s1962
          %s1964 = sshll.u32 %s1942, 4
          %s1965 = int_to_ptr.vmem [resolvable:$true] %s1964
          %1970 = dma.vmem_to_hbm [thread:$0]  %s1965, 512, %s1963, %s1939, 128, 256, 8
        $region96: #{graph_att_multihead_basic.1} parent=87 // pred_fallthru
          _
      $region88: #{graph_att_multihead_basic.1} parent=5 // pred_fallthru
        _
      %p1971 = scmp.le.s32.totalorder 2, %s31
      // Predicated region
      $region97: #{graph_att_multihead_basic.1} parent=5 // pred_check
        %p1972 = pneg %p1971
      $region98: #{graph_att_multihead_basic.1} parent=5 // pred_check_branch
        %1974 = sbr.rel (%p1972) target = $region100
      $region99: #{graph_att_multihead_basic.1} parent=5 // pred_region
        %s1975 = ssub.s32 %s31, 2
        // Predicated region
        $region101: #{graph_att_multihead_basic.1} parent=99 // pred_check
          %p1976 = pneg %p437
        $region102: #{graph_att_multihead_basic.1} parent=99 // pred_check_branch
          %1978 = sbr.rel (%p1976) target = $region104
        $region103: #{graph_att_multihead_basic.1} parent=99 // pred_region
          %s1979 = sand.u32 %s422, 1
          %s1980 = scalar_lea.sflag [#allocation3], %s1979
          %s1981 = sand.u32 %s422, 1
          %s1982 = smul.addr %s1981, 8
          %s1983 = scalar_lea.vmem [#allocation2], %s1982
          %1984 = dma.done %s1980, 128
        $region104: #{graph_att_multihead_basic.1} parent=99 // pred_fallthru
          _
        // Predicated region
        $region105: #{graph_att_multihead_basic.1} parent=99 // pred_check
          %p1985 = pneg %p463
        $region106: #{graph_att_multihead_basic.1} parent=99 // pred_check_branch
          %1987 = sbr.rel (%p1985) target = $region108
        $region107: #{graph_att_multihead_basic.1} parent=99 // pred_region
          %s1988 = sand.u32 %s448, 1
          %s1989 = scalar_lea.sflag [#allocation5], %s1988
          %s1990 = sand.u32 %s448, 1
          %s1991 = smul.addr %s1990, 32
          %s1992 = scalar_lea.vmem [#allocation4], %s1991
          %1993 = dma.done %s1989, 512
        $region108: #{graph_att_multihead_basic.1} parent=99 // pred_fallthru
          _
      $region100: #{graph_att_multihead_basic.1} parent=5 // pred_fallthru
        _
    $region6: #{graph_att_multihead_basic.1} parent=1 // loop_footer
      %s35 = sadd.s32 1, %s31
    $region7: #{graph_att_multihead_basic.1} parent=1 // loop_footer_branch
      %30 = sbr.rel target = $region3
    $region8: #{graph_att_multihead_basic.1} parent=1 // loop_exit
      _
    %1994 = vsyncpa [#allocation3], 1
    %s1995 = scalar_lea.sflag [#allocation3], 1
    %1996 = vsyncpa %s1995, 1
    %1997 = vsyncpa [#allocation5], 1
    %s1998 = scalar_lea.sflag [#allocation5], 1
    %1999 = vsyncpa %s1998, 1

</llo_original>
